<compile_context>
chip_gen: v7x
topology: tpu7x:2x2x1
jax: 0.10.0
libtpu: 0.0.40
codegen_flags: <defaults>
</compile_context>

<pallas_src>
import jax
import jax.numpy as jnp
from jax import lax
from jax.experimental import pallas as pl
from jax.experimental.pallas import tpu as pltpu


def _self_attention_kernel(x1_ref, x2_ref, wq_ref, bq_ref, wk_ref, bk_ref,
                           wv_ref, bv_ref, o_ref):
    x1 = x1_ref[0]                      # (C, HW)
    x2 = x2_ref[0]                      # (C, HW)

    # 1x1 convs as (Cout, Cin) @ (Cin, HW); spatial stays on the lane axis.
    q = jnp.dot(wq_ref[...], x1, preferred_element_type=jnp.float32) + bq_ref[...]
    k = jnp.dot(wk_ref[...], x2, preferred_element_type=jnp.float32) + bk_ref[...]
    v = jnp.dot(wv_ref[...], x2, preferred_element_type=jnp.float32) + bv_ref[...]

    # energy[i, j] = sum_c q[c, i] * k[c, j]   (transposed-LHS matmul)
    energy = lax.dot_general(q, k, (((0,), (0,)), ((), ())),
                             preferred_element_type=jnp.float32)     # (HW, HW)

    # Row softmax along the lane axis.
    energy = energy - jnp.max(energy, axis=-1, keepdims=True)
    p = jnp.exp(energy)
    attn = p / jnp.sum(p, axis=-1, keepdims=True)

    # out[c, i] = sum_j v[c, j] * attn[i, j]   (transposed-RHS matmul)
    out = lax.dot_general(v, attn, (((1,), (1,)), ((), ())),
                          preferred_element_type=jnp.float32)        # (C, HW)

    o_ref[0] = (out + x1).astype(o_ref.dtype)


def self_attention(x1, x2, wq, bq, wk, bk, wv, bv):
    """Pallas SelfAttention forward.

    x1, x2 : (B, C, H, W)
    wq, wk : (C//8, C)   bq, bk : (C//8,)
    wv     : (C, C)      bv     : (C,)
    returns: (B, C, H, W)
    """
    B, C, H, W = x1.shape
    HW = H * W
    C8 = wq.shape[0]

    # Free views: NCHW -> (B, C, HW). No transpose, no padding of the data.
    x1f = x1.reshape(B, C, HW)
    x2f = x2.reshape(B, C, HW)

    # Pad the tiny Q/K output-channel dim to a sublane multiple with zero
    # weights/biases (extra channels contribute 0 to the energy).
    C8p = max(8, ((C8 + 7) // 8) * 8)
    wq_p = jnp.zeros((C8p, C), jnp.float32).at[:C8].set(wq.astype(jnp.float32))
    wk_p = jnp.zeros((C8p, C), jnp.float32).at[:C8].set(wk.astype(jnp.float32))
    bq_p = jnp.zeros((C8p, 1), jnp.float32).at[:C8, 0].set(bq.astype(jnp.float32))
    bk_p = jnp.zeros((C8p, 1), jnp.float32).at[:C8, 0].set(bk.astype(jnp.float32))
    wv_f = wv.astype(jnp.float32)
    bv_f = bv.reshape(C, 1).astype(jnp.float32)

    itemsize = jnp.dtype(x1.dtype).itemsize
    cost = pl.CostEstimate(
        flops=B * (2 * HW * (2 * C8p * C + C * C) + 2 * HW * HW * (C8p + C)),
        transcendentals=B * HW * HW,
        bytes_accessed=3 * B * C * HW * itemsize
        + 4 * (2 * C8p * C + C * C + 2 * C8p + C),
    )

    y = pl.pallas_call(
        _self_attention_kernel,
        out_shape=jax.ShapeDtypeStruct((B, C, HW), x1.dtype),
        grid_spec=pltpu.PrefetchScalarGridSpec(
            num_scalar_prefetch=0,
            grid=(B,),
            in_specs=[
                pl.BlockSpec((1, C, HW), lambda b: (b, 0, 0)),   # x1
                pl.BlockSpec((1, C, HW), lambda b: (b, 0, 0)),   # x2
                pl.BlockSpec((C8p, C), lambda b: (0, 0)),        # wq
                pl.BlockSpec((C8p, 1), lambda b: (0, 0)),        # bq
                pl.BlockSpec((C8p, C), lambda b: (0, 0)),        # wk
                pl.BlockSpec((C8p, 1), lambda b: (0, 0)),        # bk
                pl.BlockSpec((C, C), lambda b: (0, 0)),          # wv
                pl.BlockSpec((C, 1), lambda b: (0, 0)),          # bv
            ],
            out_specs=pl.BlockSpec((1, C, HW), lambda b: (b, 0, 0)),
        ),
        compiler_params=pltpu.CompilerParams(
            dimension_semantics=("parallel",)),
        cost_estimate=cost,
    )(x1f, x2f, wq_p, bq_p, wk_p, bk_p, wv_f, bv_f)

    return y.reshape(B, C, H, W)


if __name__ == "__main__":
    key = jax.random.PRNGKey(0)
    ks = jax.random.split(key, 8)

    # in_channels must be >= 8 so that C // 8 >= 1 (as in the PyTorch module).
    B, C, H, W = 2, 16, 16, 16
    C8 = C // 8

    x1 = jax.random.normal(ks[0], (B, C, H, W), dtype=jnp.float32)
    x2 = jax.random.normal(ks[1], (B, C, H, W), dtype=jnp.float32)

    scale = 0.1
    wq = jax.random.normal(ks[2], (C8, C), dtype=jnp.float32) * scale
    bq = jax.random.normal(ks[3], (C8,), dtype=jnp.float32) * scale
    wk = jax.random.normal(ks[4], (C8, C), dtype=jnp.float32) * scale
    bk = jax.random.normal(ks[5], (C8,), dtype=jnp.float32) * scale
    wv = jax.random.normal(ks[6], (C, C), dtype=jnp.float32) * scale
    bv = jax.random.normal(ks[7], (C,), dtype=jnp.float32) * scale

    out = self_attention(x1, x2, wq, bq, wk, bk, wv, bv)
    jax.block_until_ready(out)

    # Pure-JAX reference (same math as the PyTorch forward).
    def conv1x1(x, w, b):
        return jnp.einsum("oc,bchw->bohw", w, x) + b[None, :, None, None]

    HW = H * W
    q = conv1x1(x1, wq, bq).reshape(B, C8, HW)
    k = conv1x1(x2, wk, bk).reshape(B, C8, HW)
    v = conv1x1(x2, wv, bv).reshape(B, C, HW)
    energy = jnp.einsum("bci,bcj->bij", q, k)
    attn = jax.nn.softmax(energy, axis=-1)
    ref = jnp.einsum("bcj,bij->bci", v, attn).reshape(B, C, H, W) + x1

    assert out.shape == (B, C, H, W)
    assert jnp.allclose(out, ref, atol=1e-4, rtol=1e-4), "mismatch vs reference"

    print("KERNEL_OK")
</pallas_src>

<mosaic_0001>
module attributes {stable_mosaic.version = 11 : i64} {
  func.func @_self_attention_kernel(%arg0: i32, %arg1: memref<1x16x256xf32, #tpu.memory_space<vmem>>, %arg2: memref<1x16x256xf32, #tpu.memory_space<vmem>>, %arg3: memref<8x16xf32, #tpu.memory_space<vmem>>, %arg4: memref<8x1xf32, #tpu.memory_space<vmem>>, %arg5: memref<8x16xf32, #tpu.memory_space<vmem>>, %arg6: memref<8x1xf32, #tpu.memory_space<vmem>>, %arg7: memref<16x16xf32, #tpu.memory_space<vmem>>, %arg8: memref<16x1xf32, #tpu.memory_space<vmem>>, %arg9: memref<1x16x256xf32, #tpu.memory_space<vmem>>) attributes {dimension_semantics = [#tpu.dimension_semantics<parallel>], iteration_bounds = array<i64: 2>, scalar_prefetch = 0 : i64, scratch_operands = 0 : i64, tpu.core_type = #tpu.core_type<tc>, window_params = [{transform_indices = @transform_0, window_bounds = array<i64: 1, 16, 256>}, {transform_indices = @transform_1, window_bounds = array<i64: 1, 16, 256>}, {pipeline_mode = #tpu.pipeline_mode<synchronous>, transform_indices = @transform_2, window_bounds = array<i64: 8, 16>}, {pipeline_mode = #tpu.pipeline_mode<synchronous>, transform_indices = @transform_3, window_bounds = array<i64: 8, 1>}, {pipeline_mode = #tpu.pipeline_mode<synchronous>, transform_indices = @transform_4, window_bounds = array<i64: 8, 16>}, {pipeline_mode = #tpu.pipeline_mode<synchronous>, transform_indices = @transform_5, window_bounds = array<i64: 8, 1>}, {pipeline_mode = #tpu.pipeline_mode<synchronous>, transform_indices = @transform_6, window_bounds = array<i64: 16, 16>}, {pipeline_mode = #tpu.pipeline_mode<synchronous>, transform_indices = @transform_7, window_bounds = array<i64: 16, 1>}, {transform_indices = @transform_8, window_bounds = array<i64: 1, 16, 256>}]} {
    %c0 = arith.constant 0 : index
    %c0_0 = arith.constant 0 : index
    %c0_1 = arith.constant 0 : index
    %0 = vector.load %arg1[%c0, %c0_0, %c0_1] : memref<1x16x256xf32, #tpu.memory_space<vmem>>, vector<1x16x256xf32>
    %1 = vector.shape_cast %0 : vector<1x16x256xf32> to vector<16x256xf32>
    %c0_2 = arith.constant 0 : index
    %c0_3 = arith.constant 0 : index
    %c0_4 = arith.constant 0 : index
    %2 = vector.load %arg2[%c0_2, %c0_3, %c0_4] : memref<1x16x256xf32, #tpu.memory_space<vmem>>, vector<1x16x256xf32>
    %3 = vector.shape_cast %2 : vector<1x16x256xf32> to vector<16x256xf32>
    %c0_5 = arith.constant 0 : index
    %c0_6 = arith.constant 0 : index
    %4 = vector.load %arg3[%c0_5, %c0_6] : memref<8x16xf32, #tpu.memory_space<vmem>>, vector<8x16xf32>
    %cst = arith.constant dense<0.000000e+00> : vector<8x256xf32>
    %5 = tpu.matmul %4, %1, %cst {dimension_numbers = #tpu.dot_dimension_numbers<[1], [0], [0], [1], [0, 0, 1, 1], [], []>} : vector<8x16xf32>, vector<16x256xf32>, vector<8x256xf32> -> vector<8x256xf32>
    %c0_7 = arith.constant 0 : index
    %c0_8 = arith.constant 0 : index
    %6 = vector.load %arg4[%c0_7, %c0_8] : memref<8x1xf32, #tpu.memory_space<vmem>>, vector<8x1xf32>
    %7 = vector.broadcast %6 : vector<8x1xf32> to vector<8x256xf32>
    %8 = arith.addf %5, %7 : vector<8x256xf32>
    %c0_9 = arith.constant 0 : index
    %c0_10 = arith.constant 0 : index
    %9 = vector.load %arg5[%c0_9, %c0_10] : memref<8x16xf32, #tpu.memory_space<vmem>>, vector<8x16xf32>
    %cst_11 = arith.constant dense<0.000000e+00> : vector<8x256xf32>
    %10 = tpu.matmul %9, %3, %cst_11 {dimension_numbers = #tpu.dot_dimension_numbers<[1], [0], [0], [1], [0, 0, 1, 1], [], []>} : vector<8x16xf32>, vector<16x256xf32>, vector<8x256xf32> -> vector<8x256xf32>
    %c0_12 = arith.constant 0 : index
    %c0_13 = arith.constant 0 : index
    %11 = vector.load %arg6[%c0_12, %c0_13] : memref<8x1xf32, #tpu.memory_space<vmem>>, vector<8x1xf32>
    %12 = vector.broadcast %11 : vector<8x1xf32> to vector<8x256xf32>
    %13 = arith.addf %10, %12 : vector<8x256xf32>
    %c0_14 = arith.constant 0 : index
    %c0_15 = arith.constant 0 : index
    %14 = vector.load %arg7[%c0_14, %c0_15] : memref<16x16xf32, #tpu.memory_space<vmem>>, vector<16x16xf32>
    %cst_16 = arith.constant dense<0.000000e+00> : vector<16x256xf32>
    %15 = tpu.matmul %14, %3, %cst_16 {dimension_numbers = #tpu.dot_dimension_numbers<[1], [0], [0], [1], [0, 0, 1, 1], [], []>} : vector<16x16xf32>, vector<16x256xf32>, vector<16x256xf32> -> vector<16x256xf32>
    %c0_17 = arith.constant 0 : index
    %c0_18 = arith.constant 0 : index
    %16 = vector.load %arg8[%c0_17, %c0_18] : memref<16x1xf32, #tpu.memory_space<vmem>>, vector<16x1xf32>
    %17 = vector.broadcast %16 : vector<16x1xf32> to vector<16x256xf32>
    %18 = arith.addf %15, %17 : vector<16x256xf32>
    %cst_19 = arith.constant dense<0.000000e+00> : vector<256x256xf32>
    %19 = tpu.matmul %8, %13, %cst_19 {dimension_numbers = #tpu.dot_dimension_numbers<[0], [0], [1], [1], [0, 1, 1, 1], [], []>} : vector<8x256xf32>, vector<8x256xf32>, vector<256x256xf32> -> vector<256x256xf32>
    %cst_20 = arith.constant dense<0xFF800000> : vector<256xf32>
    %20 = vector.multi_reduction <maximumf>, %19, %cst_20 [1] : vector<256x256xf32> to vector<256xf32>
    %21 = vector.shape_cast %20 : vector<256xf32> to vector<256x1xf32>
    %22 = vector.broadcast %21 : vector<256x1xf32> to vector<256x256xf32>
    %23 = arith.subf %19, %22 : vector<256x256xf32>
    %24 = math.exp %23 : vector<256x256xf32>
    %cst_21 = arith.constant dense<0.000000e+00> : vector<256xf32>
    %25 = vector.multi_reduction <add>, %24, %cst_21 [1] : vector<256x256xf32> to vector<256xf32>
    %26 = vector.shape_cast %25 : vector<256xf32> to vector<256x1xf32>
    %27 = vector.broadcast %26 : vector<256x1xf32> to vector<256x256xf32>
    %28 = arith.divf %24, %27 : vector<256x256xf32>
    %cst_22 = arith.constant dense<0.000000e+00> : vector<16x256xf32>
    %29 = tpu.matmul %18, %28, %cst_22 {dimension_numbers = #tpu.dot_dimension_numbers<[1], [1], [0], [0], [0, 0, 1, 0], [], []>} : vector<16x256xf32>, vector<256x256xf32>, vector<16x256xf32> -> vector<16x256xf32>
    %30 = arith.addf %29, %1 : vector<16x256xf32>
    %c0_23 = arith.constant 0 : index
    %c0_24 = arith.constant 0 : index
    %c0_25 = arith.constant 0 : index
    %31 = vector.load %arg9[%c0_23, %c0_24, %c0_25] : memref<1x16x256xf32, #tpu.memory_space<vmem>>, vector<1x16x256xf32>
    %32 = vector.shape_cast %31 : vector<1x16x256xf32> to vector<16x256xf32>
    %33 = vector.shape_cast %30 : vector<16x256xf32> to vector<1x16x256xf32>
    tpu.vector_store %arg9[%c0_23, %c0_24, %c0_25], %33 {strides = array<i32>} : memref<1x16x256xf32, #tpu.memory_space<vmem>>, vector<1x16x256xf32>,
    return
  }
  func.func @transform_0(%arg0: i32) -> (i32, i32, i32) {
    %c0_i32 = arith.constant 0 : i32
    %c0_i32_0 = arith.constant 0 : i32
    %c0_i32_1 = arith.constant 0 : i32
    return %arg0, %c0_i32, %c0_i32_0 : i32, i32, i32
  }
  func.func @transform_1(%arg0: i32) -> (i32, i32, i32) {
    %c0_i32 = arith.constant 0 : i32
    %c0_i32_0 = arith.constant 0 : i32
    %c0_i32_1 = arith.constant 0 : i32
    return %arg0, %c0_i32, %c0_i32_0 : i32, i32, i32
  }
  func.func @transform_2(%arg0: i32) -> (i32, i32) {
    %c0_i32 = arith.constant 0 : i32
    %c0_i32_0 = arith.constant 0 : i32
    %c0_i32_1 = arith.constant 0 : i32
    return %c0_i32, %c0_i32_0 : i32, i32
  }
  func.func @transform_3(%arg0: i32) -> (i32, i32) {
    %c0_i32 = arith.constant 0 : i32
    %c0_i32_0 = arith.constant 0 : i32
    %c0_i32_1 = arith.constant 0 : i32
    return %c0_i32, %c0_i32_0 : i32, i32
  }
  func.func @transform_4(%arg0: i32) -> (i32, i32) {
    %c0_i32 = arith.constant 0 : i32
    %c0_i32_0 = arith.constant 0 : i32
    %c0_i32_1 = arith.constant 0 : i32
    return %c0_i32, %c0_i32_0 : i32, i32
  }
  func.func @transform_5(%arg0: i32) -> (i32, i32) {
    %c0_i32 = arith.constant 0 : i32
    %c0_i32_0 = arith.constant 0 : i32
    %c0_i32_1 = arith.constant 0 : i32
    return %c0_i32, %c0_i32_0 : i32, i32
  }
  func.func @transform_6(%arg0: i32) -> (i32, i32) {
    %c0_i32 = arith.constant 0 : i32
    %c0_i32_0 = arith.constant 0 : i32
    %c0_i32_1 = arith.constant 0 : i32
    return %c0_i32, %c0_i32_0 : i32, i32
  }
  func.func @transform_7(%arg0: i32) -> (i32, i32) {
    %c0_i32 = arith.constant 0 : i32
    %c0_i32_0 = arith.constant 0 : i32
    %c0_i32_1 = arith.constant 0 : i32
    return %c0_i32, %c0_i32_0 : i32, i32
  }
  func.func @transform_8(%arg0: i32) -> (i32, i32, i32) {
    %c0_i32 = arith.constant 0 : i32
    %c0_i32_0 = arith.constant 0 : i32
    %c0_i32_1 = arith.constant 0 : i32
    return %arg0, %c0_i32, %c0_i32_0 : i32, i32, i32
  }
}

</mosaic_0001>

<llo_original>
// kernel: tpu_custom_call.1
$region0: #{tpu_custom_call.1}
  #allocation0 [shape = 'u32[]', space=smem, size = 0x4, offset = 0x4, fixed_abs, tag = 'smem constant byte address 0x4 - core index']
  #allocation1 [shape = 'u32[144,128]{1,0:T(1,128)}', space=vmem, size = 0x12000, scoped, tag = 'internal scratch']
  %s0 = inlined_call_operand.hbm [shape: f32[2,16,256], index: 0, kind: input, shape index: {}]
  %s1 = inlined_call_operand.hbm [shape: f32[2,16,256], index: 1, kind: input, shape index: {}]
  %s2 = inlined_call_operand.vmem [shape: f32[8,16], index: 2, kind: input, shape index: {}]
  %s3 = inlined_call_operand.vmem [shape: f32[8,1], index: 3, kind: input, shape index: {}]
  %s4 = inlined_call_operand.vmem [shape: f32[8,16], index: 4, kind: input, shape index: {}]
  %s5 = inlined_call_operand.vmem [shape: f32[8,1], index: 5, kind: input, shape index: {}]
  %s6 = inlined_call_operand.vmem [shape: f32[16,16], index: 6, kind: input, shape index: {}]
  %s7 = inlined_call_operand.vmem [shape: f32[16,1], index: 7, kind: input, shape index: {}]
  %s8 = inlined_call_operand.hbm [shape: f32[2,16,256], index: 8, kind: output, shape index: {}]
  %s9 = sld [smem:[#allocation0]]
  $region73: #{tpu_custom_call.1} parent=0
    _
  %s11 = ssub.s32 1, %s9
  %s12 = scalar_select 0, %s11, %s9
  $region1: #{tpu_custom_call.1} parent=0
    #allocation2 [shape = 'u8[32768]{0}', space=vmem, size = 0x8000, scoped, tag = 'input window, operand 0']
    #allocation3 [shape = 's32[2]{0}', space=sflag, size = 0x8, scoped, tag = 'scoped memory for tpu_custom_call.1']
    #allocation4 [shape = 's32[2]{0}', space=sflag, size = 0x8, scoped, tag = 'scoped memory for tpu_custom_call.1']
    #allocation5 [shape = 'u8[32768]{0}', space=vmem, size = 0x8000, scoped, tag = 'input window, operand 1']
    #allocation6 [shape = 's32[2]{0}', space=sflag, size = 0x8, scoped, tag = 'scoped memory for tpu_custom_call.1']
    #allocation7 [shape = 'u8[32768]{0}', space=vmem, size = 0x8000, scoped, tag = 'output window, operand 0']
    %13 = vsyncpa [#allocation3], 0
    %s14 = scalar_lea.sflag [#allocation3], 1
    %15 = vsyncpa %s14, 0
    %16 = vsyncpa [#allocation6], 0
    %s17 = scalar_lea.sflag [#allocation6], 1
    %18 = vsyncpa %s17, 0
    %19 = vsyncpa [#allocation4], 0
    %s20 = scalar_lea.sflag [#allocation4], 1
    %21 = vsyncpa %s20, 0
    loop: start=0, step=1, limit=4
    $region2: #{tpu_custom_call.1} parent=1 // loop_pre_header
      _
    $region3: #{tpu_custom_call.1} parent=1 // loop_header
      %s23 = sphi 0, %s27
      %p24 = scmp.ge.s32.totalorder %s23, 4
      %s33 = sphi 0, %s35
      %s36 = sphi 0, %s33
      %s37 = sphi 0, %s36
      %s53 = sphi 0, %s37
      %s59 = sphi 0, %s61
      %s62 = sphi 0, %s59
      %s63 = sphi 0, %s62
      %s79 = sphi 0, %s63
      %s83 = sphi 0, %s83
      %s85 = sphi 0, %s83
      %s86 = sphi 0, %s85
      %s100 = sphi 0, %s86
      %s104 = sphi 0, %s104
      %s106 = sphi 0, %s104
      %s107 = sphi 0, %s106
      %s121 = sphi 0, %s107
      %s125 = sphi 0, %s125
      %s127 = sphi 0, %s125
      %s128 = sphi 0, %s127
      %s142 = sphi 0, %s128
      %s146 = sphi 0, %s146
      %s148 = sphi 0, %s146
      %s149 = sphi 0, %s148
      %s163 = sphi 0, %s149
      %s167 = sphi 0, %s167
      %s169 = sphi 0, %s167
      %s170 = sphi 0, %s169
      %s184 = sphi 0, %s170
      %s188 = sphi 0, %s188
      %s190 = sphi 0, %s188
      %s191 = sphi 0, %s190
      %s205 = sphi 0, %s191
      %s211 = sphi 0, %s213
      %s214 = sphi 0, %s211
      %s215 = sphi 0, %s214
      %s231 = sphi 0, %s215
    $region4: #{tpu_custom_call.1} parent=1 // loop_header_branch
      %26 = sbr.rel (%p24) target = $region8
    $region5: #{tpu_custom_call.1} parent=1 // loop_body
      %s28 = ssub.s32 %s23, 1
      %s29 = ssub.s32 %s23, 2
      %s30 = sadd.s32 %s23, 1
      %s31 = ssub.s32 %s23, %s30
      %p32 = scmp.eq.s32.totalorder %s31, 0
      %s34 = sadd.s32 %s33, 1
      %s35 = scalar_select %p32, %s33, %s34
      %p38 = pneg %p32
      %p39 = scmp.eq.s32.totalorder %s23, 1
      %p40 = por %p38, %p39
      %p41 = scmp.ne.s32.totalorder %s33, %s36
      %p42 = scmp.eq.s32.totalorder %s23, 0
      %p43 = por %p41, %p42
      %p44 = scmp.ne.s32.totalorder %s33, %s36
      %p45 = scmp.eq.s32.totalorder %s28, 1
      %p46 = por %p44, %p45
      %p47 = scmp.ne.s32.totalorder %s36, %s37
      %p48 = scmp.eq.s32.totalorder %s28, 0
      %p49 = por %p47, %p48
      %p50 = scmp.ne.s32.totalorder %s36, %s37
      %p51 = scmp.eq.s32.totalorder %s29, 1
      %p52 = por %p50, %p51
      %p54 = scmp.ne.s32.totalorder %s37, %s53
      %p55 = scmp.eq.s32.totalorder %s29, 0
      %p56 = por %p54, %p55
      %s57 = ssub.s32 %s23, %s30
      %p58 = scmp.eq.s32.totalorder %s57, 0
      %s60 = sadd.s32 %s59, 1
      %s61 = scalar_select %p58, %s59, %s60
      %p64 = pneg %p58
      %p65 = scmp.eq.s32.totalorder %s23, 1
      %p66 = por %p64, %p65
      %p67 = scmp.ne.s32.totalorder %s59, %s62
      %p68 = scmp.eq.s32.totalorder %s23, 0
      %p69 = por %p67, %p68
      %p70 = scmp.ne.s32.totalorder %s59, %s62
      %p71 = scmp.eq.s32.totalorder %s28, 1
      %p72 = por %p70, %p71
      %p73 = scmp.ne.s32.totalorder %s62, %s63
      %p74 = scmp.eq.s32.totalorder %s28, 0
      %p75 = por %p73, %p74
      %p76 = scmp.ne.s32.totalorder %s62, %s63
      %p77 = scmp.eq.s32.totalorder %s29, 1
      %p78 = por %p76, %p77
      %p80 = scmp.ne.s32.totalorder %s63, %s79
      %p81 = scmp.eq.s32.totalorder %s29, 0
      %p82 = por %p80, %p81
      %s84 = sadd.s32 %s83, 1
      %p87 = scmp.eq.s32.totalorder %s23, 1
      %p88 = scmp.ne.s32.totalorder %s83, %s85
      %p89 = scmp.eq.s32.totalorder %s23, 0
      %p90 = por %p88, %p89
      %p91 = scmp.ne.s32.totalorder %s83, %s85
      %p92 = scmp.eq.s32.totalorder %s28, 1
      %p93 = por %p91, %p92
      %p94 = scmp.ne.s32.totalorder %s85, %s86
      %p95 = scmp.eq.s32.totalorder %s28, 0
      %p96 = por %p94, %p95
      %p97 = scmp.ne.s32.totalorder %s85, %s86
      %p98 = scmp.eq.s32.totalorder %s29, 1
      %p99 = por %p97, %p98
      %p101 = scmp.ne.s32.totalorder %s86, %s100
      %p102 = scmp.eq.s32.totalorder %s29, 0
      %p103 = por %p101, %p102
      %s105 = sadd.s32 %s104, 1
      %p108 = scmp.eq.s32.totalorder %s23, 1
      %p109 = scmp.ne.s32.totalorder %s104, %s106
      %p110 = scmp.eq.s32.totalorder %s23, 0
      %p111 = por %p109, %p110
      %p112 = scmp.ne.s32.totalorder %s104, %s106
      %p113 = scmp.eq.s32.totalorder %s28, 1
      %p114 = por %p112, %p113
      %p115 = scmp.ne.s32.totalorder %s106, %s107
      %p116 = scmp.eq.s32.totalorder %s28, 0
      %p117 = por %p115, %p116
      %p118 = scmp.ne.s32.totalorder %s106, %s107
      %p119 = scmp.eq.s32.totalorder %s29, 1
      %p120 = por %p118, %p119
      %p122 = scmp.ne.s32.totalorder %s107, %s121
      %p123 = scmp.eq.s32.totalorder %s29, 0
      %p124 = por %p122, %p123
      %s126 = sadd.s32 %s125, 1
      %p129 = scmp.eq.s32.totalorder %s23, 1
      %p130 = scmp.ne.s32.totalorder %s125, %s127
      %p131 = scmp.eq.s32.totalorder %s23, 0
      %p132 = por %p130, %p131
      %p133 = scmp.ne.s32.totalorder %s125, %s127
      %p134 = scmp.eq.s32.totalorder %s28, 1
      %p135 = por %p133, %p134
      %p136 = scmp.ne.s32.totalorder %s127, %s128
      %p137 = scmp.eq.s32.totalorder %s28, 0
      %p138 = por %p136, %p137
      %p139 = scmp.ne.s32.totalorder %s127, %s128
      %p140 = scmp.eq.s32.totalorder %s29, 1
      %p141 = por %p139, %p140
      %p143 = scmp.ne.s32.totalorder %s128, %s142
      %p144 = scmp.eq.s32.totalorder %s29, 0
      %p145 = por %p143, %p144
      %s147 = sadd.s32 %s146, 1
      %p150 = scmp.eq.s32.totalorder %s23, 1
      %p151 = scmp.ne.s32.totalorder %s146, %s148
      %p152 = scmp.eq.s32.totalorder %s23, 0
      %p153 = por %p151, %p152
      %p154 = scmp.ne.s32.totalorder %s146, %s148
      %p155 = scmp.eq.s32.totalorder %s28, 1
      %p156 = por %p154, %p155
      %p157 = scmp.ne.s32.totalorder %s148, %s149
      %p158 = scmp.eq.s32.totalorder %s28, 0
      %p159 = por %p157, %p158
      %p160 = scmp.ne.s32.totalorder %s148, %s149
      %p161 = scmp.eq.s32.totalorder %s29, 1
      %p162 = por %p160, %p161
      %p164 = scmp.ne.s32.totalorder %s149, %s163
      %p165 = scmp.eq.s32.totalorder %s29, 0
      %p166 = por %p164, %p165
      %s168 = sadd.s32 %s167, 1
      %p171 = scmp.eq.s32.totalorder %s23, 1
      %p172 = scmp.ne.s32.totalorder %s167, %s169
      %p173 = scmp.eq.s32.totalorder %s23, 0
      %p174 = por %p172, %p173
      %p175 = scmp.ne.s32.totalorder %s167, %s169
      %p176 = scmp.eq.s32.totalorder %s28, 1
      %p177 = por %p175, %p176
      %p178 = scmp.ne.s32.totalorder %s169, %s170
      %p179 = scmp.eq.s32.totalorder %s28, 0
      %p180 = por %p178, %p179
      %p181 = scmp.ne.s32.totalorder %s169, %s170
      %p182 = scmp.eq.s32.totalorder %s29, 1
      %p183 = por %p181, %p182
      %p185 = scmp.ne.s32.totalorder %s170, %s184
      %p186 = scmp.eq.s32.totalorder %s29, 0
      %p187 = por %p185, %p186
      %s189 = sadd.s32 %s188, 1
      %p192 = scmp.eq.s32.totalorder %s23, 1
      %p193 = scmp.ne.s32.totalorder %s188, %s190
      %p194 = scmp.eq.s32.totalorder %s23, 0
      %p195 = por %p193, %p194
      %p196 = scmp.ne.s32.totalorder %s188, %s190
      %p197 = scmp.eq.s32.totalorder %s28, 1
      %p198 = por %p196, %p197
      %p199 = scmp.ne.s32.totalorder %s190, %s191
      %p200 = scmp.eq.s32.totalorder %s28, 0
      %p201 = por %p199, %p200
      %p202 = scmp.ne.s32.totalorder %s190, %s191
      %p203 = scmp.eq.s32.totalorder %s29, 1
      %p204 = por %p202, %p203
      %p206 = scmp.ne.s32.totalorder %s191, %s205
      %p207 = scmp.eq.s32.totalorder %s29, 0
      %p208 = por %p206, %p207
      %s209 = ssub.s32 %s23, %s30
      %p210 = scmp.eq.s32.totalorder %s209, 0
      %s212 = sadd.s32 %s211, 1
      %s213 = scalar_select %p210, %s211, %s212
      %p216 = pneg %p210
      %p217 = scmp.eq.s32.totalorder %s23, 1
      %p218 = por %p216, %p217
      %p219 = scmp.ne.s32.totalorder %s211, %s214
      %p220 = scmp.eq.s32.totalorder %s23, 0
      %p221 = por %p219, %p220
      %p222 = scmp.ne.s32.totalorder %s211, %s214
      %p223 = scmp.eq.s32.totalorder %s28, 1
      %p224 = por %p222, %p223
      %p225 = scmp.ne.s32.totalorder %s214, %s215
      %p226 = scmp.eq.s32.totalorder %s28, 0
      %p227 = por %p225, %p226
      %p228 = scmp.ne.s32.totalorder %s214, %s215
      %p229 = scmp.eq.s32.totalorder %s29, 1
      %p230 = por %p228, %p229
      %p232 = scmp.ne.s32.totalorder %s215, %s231
      %p233 = scmp.eq.s32.totalorder %s29, 0
      %p234 = por %p232, %p233
      %p235 = scmp.le.s32.totalorder 1, %s23
      %p236 = scmp.lt.s32.totalorder %s23, 3
      %p237 = pnand %p235, %p236
      %p238 = pneg %p237
      // Predicated region
      $region9: #{tpu_custom_call.1} parent=5 // pred_check
        _
      $region10: #{tpu_custom_call.1} parent=5 // pred_check_branch
        %240 = sbr.rel (%p237) target = $region12
      $region11: #{tpu_custom_call.1} parent=5 // pred_region
        %s241 = ssub.s32 %s23, 1
        // Predicated region
        $region13: #{tpu_custom_call.1} parent=11 // pred_check
          %p242 = pneg %p96
        $region14: #{tpu_custom_call.1} parent=11 // pred_check_branch
          %244 = sbr.rel (%p242) target = $region16
        $region15: #{tpu_custom_call.1} parent=11 // pred_region
          _
        $region16: #{tpu_custom_call.1} parent=11 // pred_fallthru
          _
        // Predicated region
        $region17: #{tpu_custom_call.1} parent=11 // pred_check
          %p245 = pneg %p117
        $region18: #{tpu_custom_call.1} parent=11 // pred_check_branch
          %247 = sbr.rel (%p245) target = $region20
        $region19: #{tpu_custom_call.1} parent=11 // pred_region
          _
        $region20: #{tpu_custom_call.1} parent=11 // pred_fallthru
          _
        // Predicated region
        $region21: #{tpu_custom_call.1} parent=11 // pred_check
          %p248 = pneg %p138
        $region22: #{tpu_custom_call.1} parent=11 // pred_check_branch
          %250 = sbr.rel (%p248) target = $region24
        $region23: #{tpu_custom_call.1} parent=11 // pred_region
          _
        $region24: #{tpu_custom_call.1} parent=11 // pred_fallthru
          _
        // Predicated region
        $region25: #{tpu_custom_call.1} parent=11 // pred_check
          %p251 = pneg %p159
        $region26: #{tpu_custom_call.1} parent=11 // pred_check_branch
          %253 = sbr.rel (%p251) target = $region28
        $region27: #{tpu_custom_call.1} parent=11 // pred_region
          _
        $region28: #{tpu_custom_call.1} parent=11 // pred_fallthru
          _
        // Predicated region
        $region29: #{tpu_custom_call.1} parent=11 // pred_check
          %p254 = pneg %p180
        $region30: #{tpu_custom_call.1} parent=11 // pred_check_branch
          %256 = sbr.rel (%p254) target = $region32
        $region31: #{tpu_custom_call.1} parent=11 // pred_region
          _
        $region32: #{tpu_custom_call.1} parent=11 // pred_fallthru
          _
        // Predicated region
        $region33: #{tpu_custom_call.1} parent=11 // pred_check
          %p257 = pneg %p201
        $region34: #{tpu_custom_call.1} parent=11 // pred_check_branch
          %259 = sbr.rel (%p257) target = $region36
        $region35: #{tpu_custom_call.1} parent=11 // pred_region
          _
        $region36: #{tpu_custom_call.1} parent=11 // pred_fallthru
          _
      $region12: #{tpu_custom_call.1} parent=5 // pred_fallthru
        _
      %p260 = scmp.lt.s32.totalorder %s23, 2
      // Predicated region
      $region37: #{tpu_custom_call.1} parent=5 // pred_check
        %p261 = pneg %p260
      $region38: #{tpu_custom_call.1} parent=5 // pred_check_branch
        %263 = sbr.rel (%p261) target = $region40
      $region39: #{tpu_custom_call.1} parent=5 // pred_region
        // Predicated region
        $region41: #{tpu_custom_call.1} parent=39 // pred_check
          %p264 = pneg %p43
        $region42: #{tpu_custom_call.1} parent=39 // pred_check_branch
          %266 = sbr.rel (%p264) target = $region44
        $region43: #{tpu_custom_call.1} parent=39 // pred_region
          %s267 = sand.u32 %s33, 1
          %s268 = scalar_lea.sflag [#allocation3], %s267
          %s269 = sand.u32 %s33, 1
          %s270 = smul.addr %s269, 32
          %s271 = scalar_lea.vmem [#allocation2], %s270
          %s273 = ssub.s32 512, 512
          %274 = vsyncadd %s268, %s273
          %s275 = smul.addr %s23, 4
          %s276 = smul.addr %s275, 128
          %s277 = scalar_lea.hbm %s0, %s276
          %s278 = sshll.u32 %s271, 4
          %s279 = int_to_ptr.vmem [resolvable:$true] %s278
          %284 = dma.hbm_to_vmem [thread:$0]  %s277, 512, %s279, %s268, 256, 256, 16
        $region44: #{tpu_custom_call.1} parent=39 // pred_fallthru
          _
        // Predicated region
        $region45: #{tpu_custom_call.1} parent=39 // pred_check
          %p285 = pneg %p69
        $region46: #{tpu_custom_call.1} parent=39 // pred_check_branch
          %287 = sbr.rel (%p285) target = $region48
        $region47: #{tpu_custom_call.1} parent=39 // pred_region
          %s288 = sand.u32 %s59, 1
          %s289 = scalar_lea.sflag [#allocation6], %s288
          %s290 = sand.u32 %s59, 1
          %s291 = smul.addr %s290, 32
          %s292 = scalar_lea.vmem [#allocation5], %s291
          %s294 = ssub.s32 512, 512
          %295 = vsyncadd %s289, %s294
          %s296 = smul.addr %s23, 4
          %s297 = smul.addr %s296, 128
          %s298 = scalar_lea.hbm %s1, %s297
          %s299 = sshll.u32 %s292, 4
          %s300 = int_to_ptr.vmem [resolvable:$true] %s299
          %305 = dma.hbm_to_vmem [thread:$0]  %s298, 512, %s300, %s289, 256, 256, 16
        $region48: #{tpu_custom_call.1} parent=39 // pred_fallthru
          _
      $region40: #{tpu_custom_call.1} parent=5 // pred_fallthru
        _
      %p306 = scmp.le.s32.totalorder 1, %s23
      %p307 = scmp.lt.s32.totalorder %s23, 3
      %p308 = pnand %p306, %p307
      %p309 = pneg %p308
      // Predicated region
      $region49: #{tpu_custom_call.1} parent=5 // pred_check
        _
      $region50: #{tpu_custom_call.1} parent=5 // pred_check_branch
        %311 = sbr.rel (%p308) target = $region52
      $region51: #{tpu_custom_call.1} parent=5 // pred_region
        %s312 = ssub.s32 %s23, 1
        %s313 = sand.u32 %s36, 1
        %s314 = scalar_lea.sflag [#allocation3], %s313
        %s315 = sand.u32 %s36, 1
        %s316 = smul.addr %s315, 32
        %s317 = scalar_lea.vmem [#allocation2], %s316
        // Predicated region
        $region53: #{tpu_custom_call.1} parent=51 // pred_check
          %p318 = pneg %p49
        $region54: #{tpu_custom_call.1} parent=51 // pred_check_branch
          %320 = sbr.rel (%p318) target = $region56
        $region55: #{tpu_custom_call.1} parent=51 // pred_region
          %321 = dma.done %s314, 512
        $region56: #{tpu_custom_call.1} parent=51 // pred_fallthru
          _
        %s322 = sand.u32 %s62, 1
        %s323 = scalar_lea.sflag [#allocation6], %s322
        %s324 = sand.u32 %s62, 1
        %s325 = smul.addr %s324, 32
        %s326 = scalar_lea.vmem [#allocation5], %s325
        // Predicated region
        $region57: #{tpu_custom_call.1} parent=51 // pred_check
          %p327 = pneg %p75
        $region58: #{tpu_custom_call.1} parent=51 // pred_check_branch
          %329 = sbr.rel (%p327) target = $region60
        $region59: #{tpu_custom_call.1} parent=51 // pred_region
          %330 = dma.done %s323, 512
        $region60: #{tpu_custom_call.1} parent=51 // pred_fallthru
          _
        %s331 = sand.u32 %s36, 1
        %s332 = scalar_lea.sflag [#allocation3], %s331
        %s333 = sand.u32 %s36, 1
        %s334 = smul.addr %s333, 32
        %s335 = scalar_lea.vmem [#allocation2], %s334
        %p336 = pneg %p49
        %p337 = pneg %p46
        %s338 = sand.u32 %s62, 1
        %s339 = scalar_lea.sflag [#allocation6], %s338
        %s340 = sand.u32 %s62, 1
        %s341 = smul.addr %s340, 32
        %s342 = scalar_lea.vmem [#allocation5], %s341
        %p343 = pneg %p75
        %p344 = pneg %p72
        %p345 = pneg %p96
        %p346 = pneg %p93
        %p347 = pneg %p117
        %p348 = pneg %p114
        %p349 = pneg %p138
        %p350 = pneg %p135
        %p351 = pneg %p159
        %p352 = pneg %p156
        %p353 = pneg %p180
        %p354 = pneg %p177
        %p355 = pneg %p201
        %p356 = pneg %p198
        %p357 = pneg %p227
        %p358 = pneg %p224
        %s359 = sand.u32 %s214, 1
        %s360 = scalar_lea.sflag [#allocation4], %s359
        %s361 = sand.u32 %s214, 1
        %s362 = smul.addr %s361, 32
        %s363 = scalar_lea.vmem [#allocation7], %s362
        %v364 = vld [vmem:[%s317] sm:$0xff]
        %v365 = vld [vmem:[%s317 + $0x8] sm:$0xff]
        %v366 = vld [vmem:[%s317 + $0x10] sm:$0xff]
        %v367 = vld [vmem:[%s317 + $0x18] sm:$0xff]
        %v368 = vld [vmem:[%s326] sm:$0xff]
        %v369 = vld [vmem:[%s326 + $0x8] sm:$0xff]
        %v370 = vld [vmem:[%s326 + $0x10] sm:$0xff]
        %v371 = vld [vmem:[%s326 + $0x18] sm:$0xff]
        %v372 = vld [vmem:[%s2] sm:$0xff]
        %v373 = vld [vmem:[%s3] sm:$0xff]
        %375 = vset.pattern.permute.xlu0 0
        %376 = vperm.xlu0 %375, %v373
        %v377 = vpop.permute.xlu0 %376
        %vm379 = vcmask 130048
        %v381 = vsel %vm379, %v372, 0
        %383 = vmatprep.subr.mxu0 %v365
        %384 = vmatpush1.msra.mxu0 %v364
        %385 = vmatprep.subr.mxu0 %v367
        %386 = vmatpush1.msra.mxu0 %v366
        %387 = vmatprep.subr.mxu0 0.0
        %388 = vmatpush1.msra.mxu0 0.0
        %389 = vmatprep.subr.mxu0 0.0
        %390 = vmatpush1.msra.mxu0 0.0
        %391 = vmatprep.subr.mxu0 0.0
        %392 = vmatpush1.msra.mxu0 0.0
        %393 = vmatprep.subr.mxu0 0.0
        %394 = vmatpush1.msra.mxu0 0.0
        %395 = vmatprep.subr.mxu0 0.0
        %396 = vmatpush1.msra.mxu0 0.0
        %397 = vmatprep.subr.mxu0 0.0
        %398 = vmatpush1.msra.mxu0 0.0
        %399 = vmatprep.subr.mxu0 0.0
        %400 = vmatpush1.msra.mxu0 0.0
        %401 = vmatprep.subr.mxu0 0.0
        %402 = vmatpush1.msra.mxu0 0.0
        %403 = vmatprep.subr.mxu0 0.0
        %404 = vmatpush1.msra.mxu0 0.0
        %405 = vmatprep.subr.mxu0 0.0
        %406 = vmatpush1.msra.mxu0 0.0
        %407 = vmatprep.subr.mxu0 0.0
        %408 = vmatpush1.msra.mxu0 0.0
        %409 = vmatprep.subr.mxu0 0.0
        %410 = vmatpush1.msra.mxu0 0.0
        %411 = vmatprep.subr.mxu0 0.0
        %412 = vmatpush1.msra.mxu0 0.0
        %413 = vmatprep.subr.mxu0 0.0
        %414 = vmatpush1.msra.mxu0 0.0
        %415 = vmatprep.subr.mxu0 0.0
        %416 = vmatpush1.msra.mxu0 0.0
        %417 = vmatprep.subr.mxu0 0.0
        %418 = vmatpush1.msra.mxu0 0.0
        %419 = vmatprep.subr.mxu0 0.0
        %420 = vmatpush1.msra.mxu0 0.0
        %421 = vmatprep.subr.mxu0 0.0
        %422 = vmatpush1.msra.mxu0 0.0
        %423 = vmatprep.subr.mxu0 0.0
        %424 = vmatpush1.msra.mxu0 0.0
        %425 = vmatprep.subr.mxu0 0.0
        %426 = vmatpush1.msra.mxu0 0.0
        %427 = vmatprep.subr.mxu0 0.0
        %428 = vmatpush1.msra.mxu0 0.0
        %429 = vmatprep.subr.mxu0 0.0
        %430 = vmatpush1.msra.mxu0 0.0
        %431 = vmatprep.subr.mxu0 0.0
        %432 = vmatpush1.msra.mxu0 0.0
        %433 = vmatprep.subr.mxu0 0.0
        %434 = vmatpush1.msra.mxu0 0.0
        %435 = vmatprep.subr.mxu0 0.0
        %436 = vmatpush1.msra.mxu0 0.0
        %437 = vmatprep.subr.mxu0 0.0
        %438 = vmatpush1.msra.mxu0 0.0
        %439 = vmatprep.subr.mxu0 0.0
        %440 = vmatpush1.msra.mxu0 0.0
        %441 = vmatprep.subr.mxu0 0.0
        %442 = vmatpush1.msra.mxu0 0.0
        %443 = vmatprep.subr.mxu0 0.0
        %444 = vmatpush1.msra.mxu0 0.0
        %445 = vmatprep.subr.mxu0 0.0
        %446 = vmatpush1.msra.mxu0 0.0
        %447 = vmatprep.mubr.f32.mxu0 0.0
        %448 = vmatmul.mubr.f32.gmra.mrb[0].mxu0 %v381
        %v449 = vpop.f32.mrb[0].mxu0
        %v450 = vadd.f32 %v377, %v449
        %v451 = vpop.f32.mrb[0].mxu0
        %v452 = vadd.f32 %v377, %v451
        %453 = vdwg.mxu0
        %v454 = vld [vmem:[%s4] sm:$0xff]
        %v455 = vld [vmem:[%s5] sm:$0xff]
        %457 = vset.pattern.permute.xlu0 0
        %458 = vperm.xlu0 %457, %v455
        %v459 = vpop.permute.xlu0 %458
        %v462 = vsel %vm379, %v454, 0
        %464 = vmatprep.subr.mxu0 %v369
        %465 = vmatpush1.msra.mxu0 %v368
        %466 = vmatprep.subr.mxu0 %v371
        %467 = vmatpush1.msra.mxu0 %v370
        %468 = vmatprep.subr.mxu0 0.0
        %469 = vmatpush1.msra.mxu0 0.0
        %470 = vmatprep.subr.mxu0 0.0
        %471 = vmatpush1.msra.mxu0 0.0
        %472 = vmatprep.subr.mxu0 0.0
        %473 = vmatpush1.msra.mxu0 0.0
        %474 = vmatprep.subr.mxu0 0.0
        %475 = vmatpush1.msra.mxu0 0.0
        %476 = vmatprep.subr.mxu0 0.0
        %477 = vmatpush1.msra.mxu0 0.0
        %478 = vmatprep.subr.mxu0 0.0
        %479 = vmatpush1.msra.mxu0 0.0
        %480 = vmatprep.subr.mxu0 0.0
        %481 = vmatpush1.msra.mxu0 0.0
        %482 = vmatprep.subr.mxu0 0.0
        %483 = vmatpush1.msra.mxu0 0.0
        %484 = vmatprep.subr.mxu0 0.0
        %485 = vmatpush1.msra.mxu0 0.0
        %486 = vmatprep.subr.mxu0 0.0
        %487 = vmatpush1.msra.mxu0 0.0
        %488 = vmatprep.subr.mxu0 0.0
        %489 = vmatpush1.msra.mxu0 0.0
        %490 = vmatprep.subr.mxu0 0.0
        %491 = vmatpush1.msra.mxu0 0.0
        %492 = vmatprep.subr.mxu0 0.0
        %493 = vmatpush1.msra.mxu0 0.0
        %494 = vmatprep.subr.mxu0 0.0
        %495 = vmatpush1.msra.mxu0 0.0
        %496 = vmatprep.subr.mxu0 0.0
        %497 = vmatpush1.msra.mxu0 0.0
        %498 = vmatprep.subr.mxu0 0.0
        %499 = vmatpush1.msra.mxu0 0.0
        %500 = vmatprep.subr.mxu0 0.0
        %501 = vmatpush1.msra.mxu0 0.0
        %502 = vmatprep.subr.mxu0 0.0
        %503 = vmatpush1.msra.mxu0 0.0
        %504 = vmatprep.subr.mxu0 0.0
        %505 = vmatpush1.msra.mxu0 0.0
        %506 = vmatprep.subr.mxu0 0.0
        %507 = vmatpush1.msra.mxu0 0.0
        %508 = vmatprep.subr.mxu0 0.0
        %509 = vmatpush1.msra.mxu0 0.0
        %510 = vmatprep.subr.mxu0 0.0
        %511 = vmatpush1.msra.mxu0 0.0
        %512 = vmatprep.subr.mxu0 0.0
        %513 = vmatpush1.msra.mxu0 0.0
        %514 = vmatprep.subr.mxu0 0.0
        %515 = vmatpush1.msra.mxu0 0.0
        %516 = vmatprep.subr.mxu0 0.0
        %517 = vmatpush1.msra.mxu0 0.0
        %518 = vmatprep.subr.mxu0 0.0
        %519 = vmatpush1.msra.mxu0 0.0
        %520 = vmatprep.subr.mxu0 0.0
        %521 = vmatpush1.msra.mxu0 0.0
        %522 = vmatprep.subr.mxu0 0.0
        %523 = vmatpush1.msra.mxu0 0.0
        %524 = vmatprep.subr.mxu0 0.0
        %525 = vmatpush1.msra.mxu0 0.0
        %526 = vmatprep.subr.mxu0 0.0
        %527 = vmatpush1.msra.mxu0 0.0
        %528 = vmatprep.mubr.f32.mxu0 0.0
        %529 = vmatmul.mubr.f32.gmra.mrb[0].mxu0 %v462
        %v530 = vpop.f32.mrb[0].mxu0
        %v531 = vadd.f32 %v459, %v530
        %v532 = vpop.f32.mrb[0].mxu0
        %v533 = vadd.f32 %v459, %v532
        %534 = vdwg.mxu0
        %v535 = vld [vmem:[%s6] sm:$0xff]
        %v536 = vld [vmem:[%s6 + $0x8] sm:$0xff]
        %v537 = vld [vmem:[%s7] sm:$0xff]
        %v538 = vld [vmem:[%s7 + $0x8] sm:$0xff]
        %540 = vset.pattern.permute.xlu0 0
        %541 = vperm.xlu0 %540, %v537
        %v542 = vpop.permute.xlu0 %541
        %545 = vset.pattern.permute.xlu0 0
        %546 = vperm.xlu0 %545, %v538
        %v547 = vpop.permute.xlu0 %546
        %v550 = vsel %vm379, %v535, 0
        %v553 = vsel %vm379, %v536, 0
        %555 = vmatprep.subr.mxu0 %v369
        %556 = vmatpush1.msra.mxu0 %v368
        %557 = vmatprep.subr.mxu0 %v371
        %558 = vmatpush1.msra.mxu0 %v370
        %559 = vmatprep.subr.mxu0 0.0
        %560 = vmatpush1.msra.mxu0 0.0
        %561 = vmatprep.subr.mxu0 0.0
        %562 = vmatpush1.msra.mxu0 0.0
        %563 = vmatprep.subr.mxu0 0.0
        %564 = vmatpush1.msra.mxu0 0.0
        %565 = vmatprep.subr.mxu0 0.0
        %566 = vmatpush1.msra.mxu0 0.0
        %567 = vmatprep.subr.mxu0 0.0
        %568 = vmatpush1.msra.mxu0 0.0
        %569 = vmatprep.subr.mxu0 0.0
        %570 = vmatpush1.msra.mxu0 0.0
        %571 = vmatprep.subr.mxu0 0.0
        %572 = vmatpush1.msra.mxu0 0.0
        %573 = vmatprep.subr.mxu0 0.0
        %574 = vmatpush1.msra.mxu0 0.0
        %575 = vmatprep.subr.mxu0 0.0
        %576 = vmatpush1.msra.mxu0 0.0
        %577 = vmatprep.subr.mxu0 0.0
        %578 = vmatpush1.msra.mxu0 0.0
        %579 = vmatprep.subr.mxu0 0.0
        %580 = vmatpush1.msra.mxu0 0.0
        %581 = vmatprep.subr.mxu0 0.0
        %582 = vmatpush1.msra.mxu0 0.0
        %583 = vmatprep.subr.mxu0 0.0
        %584 = vmatpush1.msra.mxu0 0.0
        %585 = vmatprep.subr.mxu0 0.0
        %586 = vmatpush1.msra.mxu0 0.0
        %587 = vmatprep.subr.mxu0 0.0
        %588 = vmatpush1.msra.mxu0 0.0
        %589 = vmatprep.subr.mxu0 0.0
        %590 = vmatpush1.msra.mxu0 0.0
        %591 = vmatprep.subr.mxu0 0.0
        %592 = vmatpush1.msra.mxu0 0.0
        %593 = vmatprep.subr.mxu0 0.0
        %594 = vmatpush1.msra.mxu0 0.0
        %595 = vmatprep.subr.mxu0 0.0
        %596 = vmatpush1.msra.mxu0 0.0
        %597 = vmatprep.subr.mxu0 0.0
        %598 = vmatpush1.msra.mxu0 0.0
        %599 = vmatprep.subr.mxu0 0.0
        %600 = vmatpush1.msra.mxu0 0.0
        %601 = vmatprep.subr.mxu0 0.0
        %602 = vmatpush1.msra.mxu0 0.0
        %603 = vmatprep.subr.mxu0 0.0
        %604 = vmatpush1.msra.mxu0 0.0
        %605 = vmatprep.subr.mxu0 0.0
        %606 = vmatpush1.msra.mxu0 0.0
        %607 = vmatprep.subr.mxu0 0.0
        %608 = vmatpush1.msra.mxu0 0.0
        %609 = vmatprep.subr.mxu0 0.0
        %610 = vmatpush1.msra.mxu0 0.0
        %611 = vmatprep.subr.mxu0 0.0
        %612 = vmatpush1.msra.mxu0 0.0
        %613 = vmatprep.subr.mxu0 0.0
        %614 = vmatpush1.msra.mxu0 0.0
        %615 = vmatprep.subr.mxu0 0.0
        %616 = vmatpush1.msra.mxu0 0.0
        %617 = vmatprep.subr.mxu0 0.0
        %618 = vmatpush1.msra.mxu0 0.0
        %619 = vmatprep.mubr.f32.mxu0 0.0
        %620 = vmatmul.mubr.f32.gmra.mrb[0].mxu0 %v550
        %v621 = vpop.f32.mrb[0].mxu0
        %v622 = vadd.f32 %v542, %v621
        %v623 = vpop.f32.mrb[0].mxu0
        %v624 = vadd.f32 %v542, %v623
        %625 = vmatprep.mubr.f32.mxu0 0.0
        %626 = vmatmul.mubr.f32.gmra.mrb[0].mxu0 %v553
        %v627 = vpop.f32.mrb[0].mxu0
        %v628 = vadd.f32 %v547, %v627
        %v629 = vpop.f32.mrb[0].mxu0
        %v630 = vadd.f32 %v547, %v629
        %631 = vdwg.mxu0
        %632 = vxpose.xlu0.b32.start [1/16] %v450, 128
        %633 = vxpose.xlu0.b32.cont [2/16] 0.0, 128
        %634 = vxpose.xlu0.b32.cont [3/16] 0.0, 128
        %635 = vxpose.xlu0.b32.cont [4/16] 0.0, 128
        %636 = vxpose.xlu0.b32.cont [5/16] 0.0, 128
        %637 = vxpose.xlu0.b32.cont [6/16] 0.0, 128
        %638 = vxpose.xlu0.b32.cont [7/16] 0.0, 128
        %639 = vxpose.xlu0.b32.cont [8/16] 0.0, 128
        %640 = vxpose.xlu0.b32.cont [9/16] 0.0, 128
        %641 = vxpose.xlu0.b32.cont [10/16] 0.0, 128
        %642 = vxpose.xlu0.b32.cont [11/16] 0.0, 128
        %643 = vxpose.xlu0.b32.cont [12/16] 0.0, 128
        %644 = vxpose.xlu0.b32.cont [13/16] 0.0, 128
        %645 = vxpose.xlu0.b32.cont [14/16] 0.0, 128
        %646 = vxpose.xlu0.b32.cont [15/16] 0.0, 128
        %647 = vxpose.xlu0.b32.end [16/16] 0.0, 128
        %v648 = vpop.trf.xlu0
        %v649 = vpop.trf.xlu0
        %v650 = vpop.trf.xlu0
        %v651 = vpop.trf.xlu0
        %v652 = vpop.trf.xlu0
        %v653 = vpop.trf.xlu0
        %v654 = vpop.trf.xlu0
        %v655 = vpop.trf.xlu0
        %v656 = vpop.trf.xlu0
        %v657 = vpop.trf.xlu0
        %v658 = vpop.trf.xlu0
        %v659 = vpop.trf.xlu0
        %v660 = vpop.trf.xlu0
        %v661 = vpop.trf.xlu0
        %v662 = vpop.trf.xlu0
        %v663 = vpop.trf.xlu0
        %664 = vxpose.xlu0.b32.start [1/16] %v452, 128
        %665 = vxpose.xlu0.b32.cont [2/16] 0.0, 128
        %666 = vxpose.xlu0.b32.cont [3/16] 0.0, 128
        %667 = vxpose.xlu0.b32.cont [4/16] 0.0, 128
        %668 = vxpose.xlu0.b32.cont [5/16] 0.0, 128
        %669 = vxpose.xlu0.b32.cont [6/16] 0.0, 128
        %670 = vxpose.xlu0.b32.cont [7/16] 0.0, 128
        %671 = vxpose.xlu0.b32.cont [8/16] 0.0, 128
        %672 = vxpose.xlu0.b32.cont [9/16] 0.0, 128
        %673 = vxpose.xlu0.b32.cont [10/16] 0.0, 128
        %674 = vxpose.xlu0.b32.cont [11/16] 0.0, 128
        %675 = vxpose.xlu0.b32.cont [12/16] 0.0, 128
        %676 = vxpose.xlu0.b32.cont [13/16] 0.0, 128
        %677 = vxpose.xlu0.b32.cont [14/16] 0.0, 128
        %678 = vxpose.xlu0.b32.cont [15/16] 0.0, 128
        %679 = vxpose.xlu0.b32.end [16/16] 0.0, 128
        %v680 = vpop.trf.xlu0
        %v681 = vpop.trf.xlu0
        %v682 = vpop.trf.xlu0
        %v683 = vpop.trf.xlu0
        %v684 = vpop.trf.xlu0
        %v685 = vpop.trf.xlu0
        %v686 = vpop.trf.xlu0
        %v687 = vpop.trf.xlu0
        %v688 = vpop.trf.xlu0
        %v689 = vpop.trf.xlu0
        %v690 = vpop.trf.xlu0
        %v691 = vpop.trf.xlu0
        %v692 = vpop.trf.xlu0
        %v693 = vpop.trf.xlu0
        %v694 = vpop.trf.xlu0
        %v695 = vpop.trf.xlu0
        %vm696 = vcmask 64512
        %v698 = vsel %vm696, %v648, 0
        %v701 = vsel %vm696, %v649, 0
        %v704 = vsel %vm696, %v650, 0
        %v707 = vsel %vm696, %v651, 0
        %v710 = vsel %vm696, %v652, 0
        %v713 = vsel %vm696, %v653, 0
        %v716 = vsel %vm696, %v654, 0
        %v719 = vsel %vm696, %v655, 0
        %v722 = vsel %vm696, %v656, 0
        %v725 = vsel %vm696, %v657, 0
        %v728 = vsel %vm696, %v658, 0
        %v731 = vsel %vm696, %v659, 0
        %v734 = vsel %vm696, %v660, 0
        %v737 = vsel %vm696, %v661, 0
        %v740 = vsel %vm696, %v662, 0
        %v743 = vsel %vm696, %v663, 0
        %v746 = vsel %vm696, %v680, 0
        %v749 = vsel %vm696, %v681, 0
        %v752 = vsel %vm696, %v682, 0
        %v755 = vsel %vm696, %v683, 0
        %v758 = vsel %vm696, %v684, 0
        %v761 = vsel %vm696, %v685, 0
        %v764 = vsel %vm696, %v686, 0
        %v767 = vsel %vm696, %v687, 0
        %v770 = vsel %vm696, %v688, 0
        %v773 = vsel %vm696, %v689, 0
        %v776 = vsel %vm696, %v690, 0
        %v779 = vsel %vm696, %v691, 0
        %v782 = vsel %vm696, %v692, 0
        %v785 = vsel %vm696, %v693, 0
        %v788 = vsel %vm696, %v694, 0
        %v791 = vsel %vm696, %v695, 0
        %793 = vmatprep.subr.mxu0 %v533
        %794 = vmatpush1.msra.mxu0 %v531
        %795 = vmatprep.subr.mxu0 0.0
        %796 = vmatpush1.msra.mxu0 0.0
        %797 = vmatprep.subr.mxu0 0.0
        %798 = vmatpush1.msra.mxu0 0.0
        %799 = vmatprep.subr.mxu0 0.0
        %800 = vmatpush1.msra.mxu0 0.0
        %801 = vmatprep.subr.mxu0 0.0
        %802 = vmatpush1.msra.mxu0 0.0
        %803 = vmatprep.subr.mxu0 0.0
        %804 = vmatpush1.msra.mxu0 0.0
        %805 = vmatprep.subr.mxu0 0.0
        %806 = vmatpush1.msra.mxu0 0.0
        %807 = vmatprep.subr.mxu0 0.0
        %808 = vmatpush1.msra.mxu0 0.0
        %809 = vmatprep.subr.mxu0 0.0
        %810 = vmatpush1.msra.mxu0 0.0
        %811 = vmatprep.subr.mxu0 0.0
        %812 = vmatpush1.msra.mxu0 0.0
        %813 = vmatprep.subr.mxu0 0.0
        %814 = vmatpush1.msra.mxu0 0.0
        %815 = vmatprep.subr.mxu0 0.0
        %816 = vmatpush1.msra.mxu0 0.0
        %817 = vmatprep.subr.mxu0 0.0
        %818 = vmatpush1.msra.mxu0 0.0
        %819 = vmatprep.subr.mxu0 0.0
        %820 = vmatpush1.msra.mxu0 0.0
        %821 = vmatprep.subr.mxu0 0.0
        %822 = vmatpush1.msra.mxu0 0.0
        %823 = vmatprep.subr.mxu0 0.0
        %824 = vmatpush1.msra.mxu0 0.0
        %825 = vmatprep.subr.mxu0 0.0
        %826 = vmatpush1.msra.mxu0 0.0
        %827 = vmatprep.subr.mxu0 0.0
        %828 = vmatpush1.msra.mxu0 0.0
        %829 = vmatprep.subr.mxu0 0.0
        %830 = vmatpush1.msra.mxu0 0.0
        %831 = vmatprep.subr.mxu0 0.0
        %832 = vmatpush1.msra.mxu0 0.0
        %833 = vmatprep.subr.mxu0 0.0
        %834 = vmatpush1.msra.mxu0 0.0
        %835 = vmatprep.subr.mxu0 0.0
        %836 = vmatpush1.msra.mxu0 0.0
        %837 = vmatprep.subr.mxu0 0.0
        %838 = vmatpush1.msra.mxu0 0.0
        %839 = vmatprep.subr.mxu0 0.0
        %840 = vmatpush1.msra.mxu0 0.0
        %841 = vmatprep.subr.mxu0 0.0
        %842 = vmatpush1.msra.mxu0 0.0
        %843 = vmatprep.subr.mxu0 0.0
        %844 = vmatpush1.msra.mxu0 0.0
        %845 = vmatprep.subr.mxu0 0.0
        %846 = vmatpush1.msra.mxu0 0.0
        %847 = vmatprep.subr.mxu0 0.0
        %848 = vmatpush1.msra.mxu0 0.0
        %849 = vmatprep.subr.mxu0 0.0
        %850 = vmatpush1.msra.mxu0 0.0
        %851 = vmatprep.subr.mxu0 0.0
        %852 = vmatpush1.msra.mxu0 0.0
        %853 = vmatprep.subr.mxu0 0.0
        %854 = vmatpush1.msra.mxu0 0.0
        %855 = vmatprep.subr.mxu0 0.0
        %856 = vmatpush1.msra.mxu0 0.0
        %857 = vmatprep.mubr.f32.mxu0 0.0
        %858 = vmatmul.mubr.f32.gmra.mrb[0].mxu0 %v698
        %v859 = vpop.f32.mrb[0].mxu0
        %v860 = vadd.f32 0.0, %v859
        %v861 = vpop.f32.mrb[0].mxu0
        %v862 = vadd.f32 0.0, %v861
        %863 = vmatprep.mubr.f32.mxu0 0.0
        %864 = vmatmul.mubr.f32.gmra.mrb[0].mxu0 %v701
        %v865 = vpop.f32.mrb[0].mxu0
        %v866 = vadd.f32 0.0, %v865
        %v867 = vpop.f32.mrb[0].mxu0
        %v868 = vadd.f32 0.0, %v867
        %869 = vmatprep.mubr.f32.mxu0 0.0
        %870 = vmatmul.mubr.f32.gmra.mrb[0].mxu0 %v704
        %v871 = vpop.f32.mrb[0].mxu0
        %v872 = vadd.f32 0.0, %v871
        %v873 = vpop.f32.mrb[0].mxu0
        %v874 = vadd.f32 0.0, %v873
        %875 = vmatprep.mubr.f32.mxu0 0.0
        %876 = vmatmul.mubr.f32.gmra.mrb[0].mxu0 %v707
        %v877 = vpop.f32.mrb[0].mxu0
        %v878 = vadd.f32 0.0, %v877
        %v879 = vpop.f32.mrb[0].mxu0
        %v880 = vadd.f32 0.0, %v879
        %881 = vmatprep.mubr.f32.mxu0 0.0
        %882 = vmatmul.mubr.f32.gmra.mrb[0].mxu0 %v710
        %v883 = vpop.f32.mrb[0].mxu0
        %v884 = vadd.f32 0.0, %v883
        %v885 = vpop.f32.mrb[0].mxu0
        %v886 = vadd.f32 0.0, %v885
        %887 = vmatprep.mubr.f32.mxu0 0.0
        %888 = vmatmul.mubr.f32.gmra.mrb[0].mxu0 %v713
        %v889 = vpop.f32.mrb[0].mxu0
        %v890 = vadd.f32 0.0, %v889
        %v891 = vpop.f32.mrb[0].mxu0
        %v892 = vadd.f32 0.0, %v891
        %893 = vmatprep.mubr.f32.mxu0 0.0
        %894 = vmatmul.mubr.f32.gmra.mrb[0].mxu0 %v716
        %v895 = vpop.f32.mrb[0].mxu0
        %v896 = vadd.f32 0.0, %v895
        %v897 = vpop.f32.mrb[0].mxu0
        %v898 = vadd.f32 0.0, %v897
        %899 = vmatprep.mubr.f32.mxu0 0.0
        %900 = vmatmul.mubr.f32.gmra.mrb[0].mxu0 %v719
        %v901 = vpop.f32.mrb[0].mxu0
        %v902 = vadd.f32 0.0, %v901
        %v903 = vpop.f32.mrb[0].mxu0
        %v904 = vadd.f32 0.0, %v903
        %905 = vmatprep.mubr.f32.mxu0 0.0
        %906 = vmatmul.mubr.f32.gmra.mrb[0].mxu0 %v722
        %v907 = vpop.f32.mrb[0].mxu0
        %v908 = vadd.f32 0.0, %v907
        %v909 = vpop.f32.mrb[0].mxu0
        %v910 = vadd.f32 0.0, %v909
        %911 = vmatprep.mubr.f32.mxu0 0.0
        %912 = vmatmul.mubr.f32.gmra.mrb[0].mxu0 %v725
        %v913 = vpop.f32.mrb[0].mxu0
        %v914 = vadd.f32 0.0, %v913
        %v915 = vpop.f32.mrb[0].mxu0
        %v916 = vadd.f32 0.0, %v915
        %917 = vmatprep.mubr.f32.mxu0 0.0
        %918 = vmatmul.mubr.f32.gmra.mrb[0].mxu0 %v728
        %v919 = vpop.f32.mrb[0].mxu0
        %v920 = vadd.f32 0.0, %v919
        %v921 = vpop.f32.mrb[0].mxu0
        %v922 = vadd.f32 0.0, %v921
        %923 = vmatprep.mubr.f32.mxu0 0.0
        %924 = vmatmul.mubr.f32.gmra.mrb[0].mxu0 %v731
        %v925 = vpop.f32.mrb[0].mxu0
        %v926 = vadd.f32 0.0, %v925
        %v927 = vpop.f32.mrb[0].mxu0
        %v928 = vadd.f32 0.0, %v927
        %929 = vmatprep.mubr.f32.mxu0 0.0
        %930 = vmatmul.mubr.f32.gmra.mrb[0].mxu0 %v734
        %v931 = vpop.f32.mrb[0].mxu0
        %v932 = vadd.f32 0.0, %v931
        %v933 = vpop.f32.mrb[0].mxu0
        %v934 = vadd.f32 0.0, %v933
        %935 = vmatprep.mubr.f32.mxu0 0.0
        %936 = vmatmul.mubr.f32.gmra.mrb[0].mxu0 %v737
        %v937 = vpop.f32.mrb[0].mxu0
        %v938 = vadd.f32 0.0, %v937
        %v939 = vpop.f32.mrb[0].mxu0
        %v940 = vadd.f32 0.0, %v939
        %941 = vmatprep.mubr.f32.mxu0 0.0
        %942 = vmatmul.mubr.f32.gmra.mrb[0].mxu0 %v740
        %v943 = vpop.f32.mrb[0].mxu0
        %v944 = vadd.f32 0.0, %v943
        %v945 = vpop.f32.mrb[0].mxu0
        %v946 = vadd.f32 0.0, %v945
        %947 = vmatprep.mubr.f32.mxu0 0.0
        %948 = vmatmul.mubr.f32.gmra.mrb[0].mxu0 %v743
        %v949 = vpop.f32.mrb[0].mxu0
        %v950 = vadd.f32 0.0, %v949
        %v951 = vpop.f32.mrb[0].mxu0
        %v952 = vadd.f32 0.0, %v951
        %953 = vmatprep.mubr.f32.mxu0 0.0
        %954 = vmatmul.mubr.f32.gmra.mrb[0].mxu0 %v746
        %v955 = vpop.f32.mrb[0].mxu0
        %v956 = vadd.f32 0.0, %v955
        %v957 = vpop.f32.mrb[0].mxu0
        %v958 = vadd.f32 0.0, %v957
        %959 = vmatprep.mubr.f32.mxu0 0.0
        %960 = vmatmul.mubr.f32.gmra.mrb[0].mxu0 %v749
        %v961 = vpop.f32.mrb[0].mxu0
        %v962 = vadd.f32 0.0, %v961
        %v963 = vpop.f32.mrb[0].mxu0
        %v964 = vadd.f32 0.0, %v963
        %965 = vmatprep.mubr.f32.mxu0 0.0
        %966 = vmatmul.mubr.f32.gmra.mrb[0].mxu0 %v752
        %v967 = vpop.f32.mrb[0].mxu0
        %v968 = vadd.f32 0.0, %v967
        %v969 = vpop.f32.mrb[0].mxu0
        %v970 = vadd.f32 0.0, %v969
        %971 = vmatprep.mubr.f32.mxu0 0.0
        %972 = vmatmul.mubr.f32.gmra.mrb[0].mxu0 %v755
        %v973 = vpop.f32.mrb[0].mxu0
        %v974 = vadd.f32 0.0, %v973
        %v975 = vpop.f32.mrb[0].mxu0
        %v976 = vadd.f32 0.0, %v975
        %977 = vmatprep.mubr.f32.mxu0 0.0
        %978 = vmatmul.mubr.f32.gmra.mrb[0].mxu0 %v758
        %v979 = vpop.f32.mrb[0].mxu0
        %v980 = vadd.f32 0.0, %v979
        %v981 = vpop.f32.mrb[0].mxu0
        %v982 = vadd.f32 0.0, %v981
        %983 = vmatprep.mubr.f32.mxu0 0.0
        %984 = vmatmul.mubr.f32.gmra.mrb[0].mxu0 %v761
        %v985 = vpop.f32.mrb[0].mxu0
        %v986 = vadd.f32 0.0, %v985
        %v987 = vpop.f32.mrb[0].mxu0
        %v988 = vadd.f32 0.0, %v987
        %989 = vmatprep.mubr.f32.mxu0 0.0
        %990 = vmatmul.mubr.f32.gmra.mrb[0].mxu0 %v764
        %v991 = vpop.f32.mrb[0].mxu0
        %v992 = vadd.f32 0.0, %v991
        %v993 = vpop.f32.mrb[0].mxu0
        %v994 = vadd.f32 0.0, %v993
        %995 = vmatprep.mubr.f32.mxu0 0.0
        %996 = vmatmul.mubr.f32.gmra.mrb[0].mxu0 %v767
        %v997 = vpop.f32.mrb[0].mxu0
        %v998 = vadd.f32 0.0, %v997
        %v999 = vpop.f32.mrb[0].mxu0
        %v1000 = vadd.f32 0.0, %v999
        %1001 = vmatprep.mubr.f32.mxu0 0.0
        %1002 = vmatmul.mubr.f32.gmra.mrb[0].mxu0 %v770
        %v1003 = vpop.f32.mrb[0].mxu0
        %v1004 = vadd.f32 0.0, %v1003
        %v1005 = vpop.f32.mrb[0].mxu0
        %v1006 = vadd.f32 0.0, %v1005
        %1007 = vmatprep.mubr.f32.mxu0 0.0
        %1008 = vmatmul.mubr.f32.gmra.mrb[0].mxu0 %v773
        %v1009 = vpop.f32.mrb[0].mxu0
        %v1010 = vadd.f32 0.0, %v1009
        %v1011 = vpop.f32.mrb[0].mxu0
        %v1012 = vadd.f32 0.0, %v1011
        %1013 = vmatprep.mubr.f32.mxu0 0.0
        %1014 = vmatmul.mubr.f32.gmra.mrb[0].mxu0 %v776
        %v1015 = vpop.f32.mrb[0].mxu0
        %v1016 = vadd.f32 0.0, %v1015
        %v1017 = vpop.f32.mrb[0].mxu0
        %v1018 = vadd.f32 0.0, %v1017
        %1019 = vmatprep.mubr.f32.mxu0 0.0
        %1020 = vmatmul.mubr.f32.gmra.mrb[0].mxu0 %v779
        %v1021 = vpop.f32.mrb[0].mxu0
        %v1022 = vadd.f32 0.0, %v1021
        %v1023 = vpop.f32.mrb[0].mxu0
        %v1024 = vadd.f32 0.0, %v1023
        %1025 = vmatprep.mubr.f32.mxu0 0.0
        %1026 = vmatmul.mubr.f32.gmra.mrb[0].mxu0 %v782
        %v1027 = vpop.f32.mrb[0].mxu0
        %v1028 = vadd.f32 0.0, %v1027
        %v1029 = vpop.f32.mrb[0].mxu0
        %v1030 = vadd.f32 0.0, %v1029
        %1031 = vmatprep.mubr.f32.mxu0 0.0
        %1032 = vmatmul.mubr.f32.gmra.mrb[0].mxu0 %v785
        %v1033 = vpop.f32.mrb[0].mxu0
        %v1034 = vadd.f32 0.0, %v1033
        %v1035 = vpop.f32.mrb[0].mxu0
        %v1036 = vadd.f32 0.0, %v1035
        %1037 = vmatprep.mubr.f32.mxu0 0.0
        %1038 = vmatmul.mubr.f32.gmra.mrb[0].mxu0 %v788
        %v1039 = vpop.f32.mrb[0].mxu0
        %v1040 = vadd.f32 0.0, %v1039
        %v1041 = vpop.f32.mrb[0].mxu0
        %v1042 = vadd.f32 0.0, %v1041
        %1043 = vmatprep.mubr.f32.mxu0 0.0
        %1044 = vmatmul.mubr.f32.gmra.mrb[0].mxu0 %v791
        %v1045 = vpop.f32.mrb[0].mxu0
        %v1046 = vadd.f32 0.0, %v1045
        %v1047 = vpop.f32.mrb[0].mxu0
        %v1048 = vadd.f32 0.0, %v1047
        %1049 = vdwg.mxu0
        %v1050 = vmax.f32 %v860, %v862
        %1051 = vmax.xlane.f32.xlu0 %v1050
        %v1052 = vpop.xlane.xlu0 %1051
        %v1053 = vmax.f32 %v866, %v868
        %1054 = vmax.xlane.f32.xlu0 %v1053
        %v1055 = vpop.xlane.xlu0 %1054
        %v1056 = vmax.f32 %v872, %v874
        %1057 = vmax.xlane.f32.xlu0 %v1056
        %v1058 = vpop.xlane.xlu0 %1057
        %v1059 = vmax.f32 %v878, %v880
        %1060 = vmax.xlane.f32.xlu0 %v1059
        %v1061 = vpop.xlane.xlu0 %1060
        %v1062 = vmax.f32 %v884, %v886
        %1063 = vmax.xlane.f32.xlu0 %v1062
        %v1064 = vpop.xlane.xlu0 %1063
        %v1065 = vmax.f32 %v890, %v892
        %1066 = vmax.xlane.f32.xlu0 %v1065
        %v1067 = vpop.xlane.xlu0 %1066
        %v1068 = vmax.f32 %v896, %v898
        %1069 = vmax.xlane.f32.xlu0 %v1068
        %v1070 = vpop.xlane.xlu0 %1069
        %v1071 = vmax.f32 %v902, %v904
        %1072 = vmax.xlane.f32.xlu0 %v1071
        %v1073 = vpop.xlane.xlu0 %1072
        %v1074 = vmax.f32 %v908, %v910
        %1075 = vmax.xlane.f32.xlu0 %v1074
        %v1076 = vpop.xlane.xlu0 %1075
        %v1077 = vmax.f32 %v914, %v916
        %1078 = vmax.xlane.f32.xlu0 %v1077
        %v1079 = vpop.xlane.xlu0 %1078
        %v1080 = vmax.f32 %v920, %v922
        %1081 = vmax.xlane.f32.xlu0 %v1080
        %v1082 = vpop.xlane.xlu0 %1081
        %v1083 = vmax.f32 %v926, %v928
        %1084 = vmax.xlane.f32.xlu0 %v1083
        %v1085 = vpop.xlane.xlu0 %1084
        %v1086 = vmax.f32 %v932, %v934
        %1087 = vmax.xlane.f32.xlu0 %v1086
        %v1088 = vpop.xlane.xlu0 %1087
        %v1089 = vmax.f32 %v938, %v940
        %1090 = vmax.xlane.f32.xlu0 %v1089
        %v1091 = vpop.xlane.xlu0 %1090
        %v1092 = vmax.f32 %v944, %v946
        %1093 = vmax.xlane.f32.xlu0 %v1092
        %v1094 = vpop.xlane.xlu0 %1093
        %v1095 = vmax.f32 %v950, %v952
        %1096 = vmax.xlane.f32.xlu0 %v1095
        %v1097 = vpop.xlane.xlu0 %1096
        %v1098 = vmax.f32 %v956, %v958
        %1099 = vmax.xlane.f32.xlu0 %v1098
        %v1100 = vpop.xlane.xlu0 %1099
        %v1101 = vmax.f32 %v962, %v964
        %1102 = vmax.xlane.f32.xlu0 %v1101
        %v1103 = vpop.xlane.xlu0 %1102
        %v1104 = vmax.f32 %v968, %v970
        %1105 = vmax.xlane.f32.xlu0 %v1104
        %v1106 = vpop.xlane.xlu0 %1105
        %v1107 = vmax.f32 %v974, %v976
        %1108 = vmax.xlane.f32.xlu0 %v1107
        %v1109 = vpop.xlane.xlu0 %1108
        %v1110 = vmax.f32 %v980, %v982
        %1111 = vmax.xlane.f32.xlu0 %v1110
        %v1112 = vpop.xlane.xlu0 %1111
        %v1113 = vmax.f32 %v986, %v988
        %1114 = vmax.xlane.f32.xlu0 %v1113
        %v1115 = vpop.xlane.xlu0 %1114
        %v1116 = vmax.f32 %v992, %v994
        %1117 = vmax.xlane.f32.xlu0 %v1116
        %v1118 = vpop.xlane.xlu0 %1117
        %v1119 = vmax.f32 %v998, %v1000
        %1120 = vmax.xlane.f32.xlu0 %v1119
        %v1121 = vpop.xlane.xlu0 %1120
        %v1122 = vmax.f32 %v1004, %v1006
        %1123 = vmax.xlane.f32.xlu0 %v1122
        %v1124 = vpop.xlane.xlu0 %1123
        %v1125 = vmax.f32 %v1010, %v1012
        %1126 = vmax.xlane.f32.xlu0 %v1125
        %v1127 = vpop.xlane.xlu0 %1126
        %v1128 = vmax.f32 %v1016, %v1018
        %1129 = vmax.xlane.f32.xlu0 %v1128
        %v1130 = vpop.xlane.xlu0 %1129
        %v1131 = vmax.f32 %v1022, %v1024
        %1132 = vmax.xlane.f32.xlu0 %v1131
        %v1133 = vpop.xlane.xlu0 %1132
        %v1134 = vmax.f32 %v1028, %v1030
        %1135 = vmax.xlane.f32.xlu0 %v1134
        %v1136 = vpop.xlane.xlu0 %1135
        %v1137 = vmax.f32 %v1034, %v1036
        %1138 = vmax.xlane.f32.xlu0 %v1137
        %v1139 = vpop.xlane.xlu0 %1138
        %v1140 = vmax.f32 %v1040, %v1042
        %1141 = vmax.xlane.f32.xlu0 %v1140
        %v1142 = vpop.xlane.xlu0 %1141
        %v1143 = vmax.f32 %v1046, %v1048
        %1144 = vmax.xlane.f32.xlu0 %v1143
        %v1145 = vpop.xlane.xlu0 %1144
        %v1146 = vsub.f32 %v860, %v1052
        %v1147 = vsub.f32 %v862, %v1052
        %v1148 = vsub.f32 %v866, %v1055
        %v1149 = vsub.f32 %v868, %v1055
        %v1150 = vsub.f32 %v872, %v1058
        %v1151 = vsub.f32 %v874, %v1058
        %v1152 = vsub.f32 %v878, %v1061
        %v1153 = vsub.f32 %v880, %v1061
        %v1154 = vsub.f32 %v884, %v1064
        %v1155 = vsub.f32 %v886, %v1064
        %v1156 = vsub.f32 %v890, %v1067
        %v1157 = vsub.f32 %v892, %v1067
        %v1158 = vsub.f32 %v896, %v1070
        %v1159 = vsub.f32 %v898, %v1070
        %v1160 = vsub.f32 %v902, %v1073
        %v1161 = vsub.f32 %v904, %v1073
        %v1162 = vsub.f32 %v908, %v1076
        %v1163 = vsub.f32 %v910, %v1076
        %v1164 = vsub.f32 %v914, %v1079
        %v1165 = vsub.f32 %v916, %v1079
        %v1166 = vsub.f32 %v920, %v1082
        %v1167 = vsub.f32 %v922, %v1082
        %v1168 = vsub.f32 %v926, %v1085
        %v1169 = vsub.f32 %v928, %v1085
        %v1170 = vsub.f32 %v932, %v1088
        %v1171 = vsub.f32 %v934, %v1088
        %v1172 = vsub.f32 %v938, %v1091
        %v1173 = vsub.f32 %v940, %v1091
        %v1174 = vsub.f32 %v944, %v1094
        %v1175 = vsub.f32 %v946, %v1094
        %v1176 = vsub.f32 %v950, %v1097
        %v1177 = vsub.f32 %v952, %v1097
        %v1178 = vsub.f32 %v956, %v1100
        %v1179 = vsub.f32 %v958, %v1100
        %v1180 = vsub.f32 %v962, %v1103
        %v1181 = vsub.f32 %v964, %v1103
        %v1182 = vsub.f32 %v968, %v1106
        %v1183 = vsub.f32 %v970, %v1106
        %v1184 = vsub.f32 %v974, %v1109
        %v1185 = vsub.f32 %v976, %v1109
        %v1186 = vsub.f32 %v980, %v1112
        %v1187 = vsub.f32 %v982, %v1112
        %v1188 = vsub.f32 %v986, %v1115
        %v1189 = vsub.f32 %v988, %v1115
        %v1190 = vsub.f32 %v992, %v1118
        %v1191 = vsub.f32 %v994, %v1118
        %v1192 = vsub.f32 %v998, %v1121
        %v1193 = vsub.f32 %v1000, %v1121
        %v1194 = vsub.f32 %v1004, %v1124
        %v1195 = vsub.f32 %v1006, %v1124
        %v1196 = vsub.f32 %v1010, %v1127
        %v1197 = vsub.f32 %v1012, %v1127
        %v1198 = vsub.f32 %v1016, %v1130
        %v1199 = vsub.f32 %v1018, %v1130
        %v1200 = vsub.f32 %v1022, %v1133
        %v1201 = vsub.f32 %v1024, %v1133
        %v1202 = vsub.f32 %v1028, %v1136
        %v1203 = vsub.f32 %v1030, %v1136
        %v1204 = vsub.f32 %v1034, %v1139
        %v1205 = vsub.f32 %v1036, %v1139
        %v1206 = vsub.f32 %v1040, %v1142
        %v1207 = vsub.f32 %v1042, %v1142
        %v1208 = vsub.f32 %v1046, %v1145
        %v1209 = vsub.f32 %v1048, %v1145
        %v1210 = vmul.f32 %v1146, 1.442695
        %v1211 = vpow.pop %v1210
        %v1212 = vmul.f32 %v1147, 1.442695
        %v1213 = vpow.pop %v1212
        %v1214 = vmul.f32 %v1148, 1.442695
        %v1215 = vpow.pop %v1214
        %v1216 = vmul.f32 %v1149, 1.442695
        %v1217 = vpow.pop %v1216
        %v1218 = vmul.f32 %v1150, 1.442695
        %v1219 = vpow.pop %v1218
        %v1220 = vmul.f32 %v1151, 1.442695
        %v1221 = vpow.pop %v1220
        %v1222 = vmul.f32 %v1152, 1.442695
        %v1223 = vpow.pop %v1222
        %v1224 = vmul.f32 %v1153, 1.442695
        %v1225 = vpow.pop %v1224
        %v1226 = vmul.f32 %v1154, 1.442695
        %v1227 = vpow.pop %v1226
        %v1228 = vmul.f32 %v1155, 1.442695
        %v1229 = vpow.pop %v1228
        %v1230 = vmul.f32 %v1156, 1.442695
        %v1231 = vpow.pop %v1230
        %v1232 = vmul.f32 %v1157, 1.442695
        %v1233 = vpow.pop %v1232
        %v1234 = vmul.f32 %v1158, 1.442695
        %v1235 = vpow.pop %v1234
        %v1236 = vmul.f32 %v1159, 1.442695
        %v1237 = vpow.pop %v1236
        %v1238 = vmul.f32 %v1160, 1.442695
        %v1239 = vpow.pop %v1238
        %v1240 = vmul.f32 %v1161, 1.442695
        %v1241 = vpow.pop %v1240
        %v1242 = vmul.f32 %v1162, 1.442695
        %v1243 = vpow.pop %v1242
        %v1244 = vmul.f32 %v1163, 1.442695
        %v1245 = vpow.pop %v1244
        %v1246 = vmul.f32 %v1164, 1.442695
        %v1247 = vpow.pop %v1246
        %v1248 = vmul.f32 %v1165, 1.442695
        %v1249 = vpow.pop %v1248
        %v1250 = vmul.f32 %v1166, 1.442695
        %v1251 = vpow.pop %v1250
        %v1252 = vmul.f32 %v1167, 1.442695
        %v1253 = vpow.pop %v1252
        %v1254 = vmul.f32 %v1168, 1.442695
        %v1255 = vpow.pop %v1254
        %v1256 = vmul.f32 %v1169, 1.442695
        %v1257 = vpow.pop %v1256
        %v1258 = vmul.f32 %v1170, 1.442695
        %v1259 = vpow.pop %v1258
        %v1260 = vmul.f32 %v1171, 1.442695
        %v1261 = vpow.pop %v1260
        %v1262 = vmul.f32 %v1172, 1.442695
        %v1263 = vpow.pop %v1262
        %v1264 = vmul.f32 %v1173, 1.442695
        %v1265 = vpow.pop %v1264
        %v1266 = vmul.f32 %v1174, 1.442695
        %v1267 = vpow.pop %v1266
        %v1268 = vmul.f32 %v1175, 1.442695
        %v1269 = vpow.pop %v1268
        %v1270 = vmul.f32 %v1176, 1.442695
        %v1271 = vpow.pop %v1270
        %v1272 = vmul.f32 %v1177, 1.442695
        %v1273 = vpow.pop %v1272
        %v1274 = vmul.f32 %v1178, 1.442695
        %v1275 = vpow.pop %v1274
        %v1276 = vmul.f32 %v1179, 1.442695
        %v1277 = vpow.pop %v1276
        %v1278 = vmul.f32 %v1180, 1.442695
        %v1279 = vpow.pop %v1278
        %v1280 = vmul.f32 %v1181, 1.442695
        %v1281 = vpow.pop %v1280
        %v1282 = vmul.f32 %v1182, 1.442695
        %v1283 = vpow.pop %v1282
        %v1284 = vmul.f32 %v1183, 1.442695
        %v1285 = vpow.pop %v1284
        %v1286 = vmul.f32 %v1184, 1.442695
        %v1287 = vpow.pop %v1286
        %v1288 = vmul.f32 %v1185, 1.442695
        %v1289 = vpow.pop %v1288
        %v1290 = vmul.f32 %v1186, 1.442695
        %v1291 = vpow.pop %v1290
        %v1292 = vmul.f32 %v1187, 1.442695
        %v1293 = vpow.pop %v1292
        %v1294 = vmul.f32 %v1188, 1.442695
        %v1295 = vpow.pop %v1294
        %v1296 = vmul.f32 %v1189, 1.442695
        %v1297 = vpow.pop %v1296
        %v1298 = vmul.f32 %v1190, 1.442695
        %v1299 = vpow.pop %v1298
        %v1300 = vmul.f32 %v1191, 1.442695
        %v1301 = vpow.pop %v1300
        %v1302 = vmul.f32 %v1192, 1.442695
        %v1303 = vpow.pop %v1302
        %v1304 = vmul.f32 %v1193, 1.442695
        %v1305 = vpow.pop %v1304
        %v1306 = vmul.f32 %v1194, 1.442695
        %v1307 = vpow.pop %v1306
        %v1308 = vmul.f32 %v1195, 1.442695
        %v1309 = vpow.pop %v1308
        %v1310 = vmul.f32 %v1196, 1.442695
        %v1311 = vpow.pop %v1310
        %v1312 = vmul.f32 %v1197, 1.442695
        %v1313 = vpow.pop %v1312
        %v1314 = vmul.f32 %v1198, 1.442695
        %v1315 = vpow.pop %v1314
        %v1316 = vmul.f32 %v1199, 1.442695
        %v1317 = vpow.pop %v1316
        %v1318 = vmul.f32 %v1200, 1.442695
        %v1319 = vpow.pop %v1318
        %v1320 = vmul.f32 %v1201, 1.442695
        %v1321 = vpow.pop %v1320
        %v1322 = vmul.f32 %v1202, 1.442695
        %v1323 = vpow.pop %v1322
        %v1324 = vmul.f32 %v1203, 1.442695
        %v1325 = vpow.pop %v1324
        %v1326 = vmul.f32 %v1204, 1.442695
        %v1327 = vpow.pop %v1326
        %v1328 = vmul.f32 %v1205, 1.442695
        %v1329 = vpow.pop %v1328
        %v1330 = vmul.f32 %v1206, 1.442695
        %v1331 = vpow.pop %v1330
        %v1332 = vmul.f32 %v1207, 1.442695
        %v1333 = vpow.pop %v1332
        %v1334 = vmul.f32 %v1208, 1.442695
        %v1335 = vpow.pop %v1334
        %v1336 = vmul.f32 %v1209, 1.442695
        %v1337 = vpow.pop %v1336
        %v1338 = vadd.f32 %v1211, %v1213
        %1339 = vadd.xlane.f32.xlu0 %v1338
        %v1340 = vpop.xlane.xlu0 %1339
        %v1341 = vadd.f32 %v1215, %v1217
        %1342 = vadd.xlane.f32.xlu0 %v1341
        %v1343 = vpop.xlane.xlu0 %1342
        %v1344 = vadd.f32 %v1219, %v1221
        %1345 = vadd.xlane.f32.xlu0 %v1344
        %v1346 = vpop.xlane.xlu0 %1345
        %v1347 = vadd.f32 %v1223, %v1225
        %1348 = vadd.xlane.f32.xlu0 %v1347
        %v1349 = vpop.xlane.xlu0 %1348
        %v1350 = vadd.f32 %v1227, %v1229
        %1351 = vadd.xlane.f32.xlu0 %v1350
        %v1352 = vpop.xlane.xlu0 %1351
        %v1353 = vadd.f32 %v1231, %v1233
        %1354 = vadd.xlane.f32.xlu0 %v1353
        %v1355 = vpop.xlane.xlu0 %1354
        %v1356 = vadd.f32 %v1235, %v1237
        %1357 = vadd.xlane.f32.xlu0 %v1356
        %v1358 = vpop.xlane.xlu0 %1357
        %v1359 = vadd.f32 %v1239, %v1241
        %1360 = vadd.xlane.f32.xlu0 %v1359
        %v1361 = vpop.xlane.xlu0 %1360
        %v1362 = vadd.f32 %v1243, %v1245
        %1363 = vadd.xlane.f32.xlu0 %v1362
        %v1364 = vpop.xlane.xlu0 %1363
        %v1365 = vadd.f32 %v1247, %v1249
        %1366 = vadd.xlane.f32.xlu0 %v1365
        %v1367 = vpop.xlane.xlu0 %1366
        %v1368 = vadd.f32 %v1251, %v1253
        %1369 = vadd.xlane.f32.xlu0 %v1368
        %v1370 = vpop.xlane.xlu0 %1369
        %v1371 = vadd.f32 %v1255, %v1257
        %1372 = vadd.xlane.f32.xlu0 %v1371
        %v1373 = vpop.xlane.xlu0 %1372
        %v1374 = vadd.f32 %v1259, %v1261
        %1375 = vadd.xlane.f32.xlu0 %v1374
        %v1376 = vpop.xlane.xlu0 %1375
        %v1377 = vadd.f32 %v1263, %v1265
        %1378 = vadd.xlane.f32.xlu0 %v1377
        %v1379 = vpop.xlane.xlu0 %1378
        %v1380 = vadd.f32 %v1267, %v1269
        %1381 = vadd.xlane.f32.xlu0 %v1380
        %v1382 = vpop.xlane.xlu0 %1381
        %v1383 = vadd.f32 %v1271, %v1273
        %1384 = vadd.xlane.f32.xlu0 %v1383
        %v1385 = vpop.xlane.xlu0 %1384
        %v1386 = vadd.f32 %v1275, %v1277
        %1387 = vadd.xlane.f32.xlu0 %v1386
        %v1388 = vpop.xlane.xlu0 %1387
        %v1389 = vadd.f32 %v1279, %v1281
        %1390 = vadd.xlane.f32.xlu0 %v1389
        %v1391 = vpop.xlane.xlu0 %1390
        %v1392 = vadd.f32 %v1283, %v1285
        %1393 = vadd.xlane.f32.xlu0 %v1392
        %v1394 = vpop.xlane.xlu0 %1393
        %v1395 = vadd.f32 %v1287, %v1289
        %1396 = vadd.xlane.f32.xlu0 %v1395
        %v1397 = vpop.xlane.xlu0 %1396
        %v1398 = vadd.f32 %v1291, %v1293
        %1399 = vadd.xlane.f32.xlu0 %v1398
        %v1400 = vpop.xlane.xlu0 %1399
        %v1401 = vadd.f32 %v1295, %v1297
        %1402 = vadd.xlane.f32.xlu0 %v1401
        %v1403 = vpop.xlane.xlu0 %1402
        %v1404 = vadd.f32 %v1299, %v1301
        %1405 = vadd.xlane.f32.xlu0 %v1404
        %v1406 = vpop.xlane.xlu0 %1405
        %v1407 = vadd.f32 %v1303, %v1305
        %1408 = vadd.xlane.f32.xlu0 %v1407
        %v1409 = vpop.xlane.xlu0 %1408
        %v1410 = vadd.f32 %v1307, %v1309
        %1411 = vadd.xlane.f32.xlu0 %v1410
        %v1412 = vpop.xlane.xlu0 %1411
        %v1413 = vadd.f32 %v1311, %v1313
        %1414 = vadd.xlane.f32.xlu0 %v1413
        %v1415 = vpop.xlane.xlu0 %1414
        %v1416 = vadd.f32 %v1315, %v1317
        %1417 = vadd.xlane.f32.xlu0 %v1416
        %v1418 = vpop.xlane.xlu0 %1417
        %v1419 = vadd.f32 %v1319, %v1321
        %1420 = vadd.xlane.f32.xlu0 %v1419
        %v1421 = vpop.xlane.xlu0 %1420
        %v1422 = vadd.f32 %v1323, %v1325
        %1423 = vadd.xlane.f32.xlu0 %v1422
        %v1424 = vpop.xlane.xlu0 %1423
        %v1425 = vadd.f32 %v1327, %v1329
        %1426 = vadd.xlane.f32.xlu0 %v1425
        %v1427 = vpop.xlane.xlu0 %1426
        %v1428 = vadd.f32 %v1331, %v1333
        %1429 = vadd.xlane.f32.xlu0 %v1428
        %v1430 = vpop.xlane.xlu0 %1429
        %v1431 = vadd.f32 %v1335, %v1337
        %1432 = vadd.xlane.f32.xlu0 %v1431
        %v1433 = vpop.xlane.xlu0 %1432
        %v1434 = vrcp.pop %v1340
        %v1435 = vmul.f32 %v1211, %v1434
        %v1436 = vmul.f32 %v1213, %v1434
        %v1437 = vrcp.pop %v1343
        %v1438 = vmul.f32 %v1215, %v1437
        %v1439 = vmul.f32 %v1217, %v1437
        %v1440 = vrcp.pop %v1346
        %v1441 = vmul.f32 %v1219, %v1440
        %v1442 = vmul.f32 %v1221, %v1440
        %v1443 = vrcp.pop %v1349
        %v1444 = vmul.f32 %v1223, %v1443
        %v1445 = vmul.f32 %v1225, %v1443
        %v1446 = vrcp.pop %v1352
        %v1447 = vmul.f32 %v1227, %v1446
        %v1448 = vmul.f32 %v1229, %v1446
        %v1449 = vrcp.pop %v1355
        %v1450 = vmul.f32 %v1231, %v1449
        %v1451 = vmul.f32 %v1233, %v1449
        %v1452 = vrcp.pop %v1358
        %v1453 = vmul.f32 %v1235, %v1452
        %v1454 = vmul.f32 %v1237, %v1452
        %v1455 = vrcp.pop %v1361
        %v1456 = vmul.f32 %v1239, %v1455
        %v1457 = vmul.f32 %v1241, %v1455
        %v1458 = vrcp.pop %v1364
        %v1459 = vmul.f32 %v1243, %v1458
        %v1460 = vmul.f32 %v1245, %v1458
        %v1461 = vrcp.pop %v1367
        %v1462 = vmul.f32 %v1247, %v1461
        %v1463 = vmul.f32 %v1249, %v1461
        %v1464 = vrcp.pop %v1370
        %v1465 = vmul.f32 %v1251, %v1464
        %v1466 = vmul.f32 %v1253, %v1464
        %v1467 = vrcp.pop %v1373
        %v1468 = vmul.f32 %v1255, %v1467
        %v1469 = vmul.f32 %v1257, %v1467
        %v1470 = vrcp.pop %v1376
        %v1471 = vmul.f32 %v1259, %v1470
        %v1472 = vmul.f32 %v1261, %v1470
        %v1473 = vrcp.pop %v1379
        %v1474 = vmul.f32 %v1263, %v1473
        %v1475 = vmul.f32 %v1265, %v1473
        %v1476 = vrcp.pop %v1382
        %v1477 = vmul.f32 %v1267, %v1476
        %v1478 = vmul.f32 %v1269, %v1476
        %v1479 = vrcp.pop %v1385
        %v1480 = vmul.f32 %v1271, %v1479
        %v1481 = vmul.f32 %v1273, %v1479
        %v1482 = vrcp.pop %v1388
        %v1483 = vmul.f32 %v1275, %v1482
        %v1484 = vmul.f32 %v1277, %v1482
        %v1485 = vrcp.pop %v1391
        %v1486 = vmul.f32 %v1279, %v1485
        %v1487 = vmul.f32 %v1281, %v1485
        %v1488 = vrcp.pop %v1394
        %v1489 = vmul.f32 %v1283, %v1488
        %v1490 = vmul.f32 %v1285, %v1488
        %v1491 = vrcp.pop %v1397
        %v1492 = vmul.f32 %v1287, %v1491
        %v1493 = vmul.f32 %v1289, %v1491
        %v1494 = vrcp.pop %v1400
        %v1495 = vmul.f32 %v1291, %v1494
        %v1496 = vmul.f32 %v1293, %v1494
        %v1497 = vrcp.pop %v1403
        %v1498 = vmul.f32 %v1295, %v1497
        %v1499 = vmul.f32 %v1297, %v1497
        %v1500 = vrcp.pop %v1406
        %v1501 = vmul.f32 %v1299, %v1500
        %v1502 = vmul.f32 %v1301, %v1500
        %v1503 = vrcp.pop %v1409
        %v1504 = vmul.f32 %v1303, %v1503
        %v1505 = vmul.f32 %v1305, %v1503
        %v1506 = vrcp.pop %v1412
        %v1507 = vmul.f32 %v1307, %v1506
        %v1508 = vmul.f32 %v1309, %v1506
        %v1509 = vrcp.pop %v1415
        %v1510 = vmul.f32 %v1311, %v1509
        %v1511 = vmul.f32 %v1313, %v1509
        %v1512 = vrcp.pop %v1418
        %v1513 = vmul.f32 %v1315, %v1512
        %v1514 = vmul.f32 %v1317, %v1512
        %v1515 = vrcp.pop %v1421
        %v1516 = vmul.f32 %v1319, %v1515
        %v1517 = vmul.f32 %v1321, %v1515
        %v1518 = vrcp.pop %v1424
        %v1519 = vmul.f32 %v1323, %v1518
        %v1520 = vmul.f32 %v1325, %v1518
        %v1521 = vrcp.pop %v1427
        %v1522 = vmul.f32 %v1327, %v1521
        %v1523 = vmul.f32 %v1329, %v1521
        %v1524 = vrcp.pop %v1430
        %v1525 = vmul.f32 %v1331, %v1524
        %v1526 = vmul.f32 %v1333, %v1524
        %v1527 = vrcp.pop %v1433
        %v1528 = vmul.f32 %v1335, %v1527
        %v1529 = vmul.f32 %v1337, %v1527
        %1530 = vmatprep.subr.mxu0 %v1436
        %1531 = vmatpush1.xpose.msra.mxu0 %v1435
        %1532 = vmatprep.subr.mxu0 %v1439
        %1533 = vmatpush1.xpose.msra.mxu0 %v1438
        %1534 = vmatprep.subr.mxu0 %v1442
        %1535 = vmatpush1.xpose.msra.mxu0 %v1441
        %1536 = vmatprep.subr.mxu0 %v1445
        %1537 = vmatpush1.xpose.msra.mxu0 %v1444
        %1538 = vmatprep.subr.mxu0 %v1448
        %1539 = vmatpush1.xpose.msra.mxu0 %v1447
        %1540 = vmatprep.subr.mxu0 %v1451
        %1541 = vmatpush1.xpose.msra.mxu0 %v1450
        %1542 = vmatprep.subr.mxu0 %v1454
        %1543 = vmatpush1.xpose.msra.mxu0 %v1453
        %1544 = vmatprep.subr.mxu0 %v1457
        %1545 = vmatpush1.xpose.msra.mxu0 %v1456
        %1546 = vmatprep.subr.mxu0 %v1460
        %1547 = vmatpush1.xpose.msra.mxu0 %v1459
        %1548 = vmatprep.subr.mxu0 %v1463
        %1549 = vmatpush1.xpose.msra.mxu0 %v1462
        %1550 = vmatprep.subr.mxu0 %v1466
        %1551 = vmatpush1.xpose.msra.mxu0 %v1465
        %1552 = vmatprep.subr.mxu0 %v1469
        %1553 = vmatpush1.xpose.msra.mxu0 %v1468
        %1554 = vmatprep.subr.mxu0 %v1472
        %1555 = vmatpush1.xpose.msra.mxu0 %v1471
        %1556 = vmatprep.subr.mxu0 %v1475
        %1557 = vmatpush1.xpose.msra.mxu0 %v1474
        %1558 = vmatprep.subr.mxu0 %v1478
        %1559 = vmatpush1.xpose.msra.mxu0 %v1477
        %1560 = vmatprep.subr.mxu0 %v1481
        %1561 = vmatpush1.xpose.msra.mxu0 %v1480
        %1562 = vmatprep.subr.mxu0 %v1484
        %1563 = vmatpush1.xpose.msra.mxu0 %v1483
        %1564 = vmatprep.subr.mxu0 %v1487
        %1565 = vmatpush1.xpose.msra.mxu0 %v1486
        %1566 = vmatprep.subr.mxu0 %v1490
        %1567 = vmatpush1.xpose.msra.mxu0 %v1489
        %1568 = vmatprep.subr.mxu0 %v1493
        %1569 = vmatpush1.xpose.msra.mxu0 %v1492
        %1570 = vmatprep.subr.mxu0 %v1496
        %1571 = vmatpush1.xpose.msra.mxu0 %v1495
        %1572 = vmatprep.subr.mxu0 %v1499
        %1573 = vmatpush1.xpose.msra.mxu0 %v1498
        %1574 = vmatprep.subr.mxu0 %v1502
        %1575 = vmatpush1.xpose.msra.mxu0 %v1501
        %1576 = vmatprep.subr.mxu0 %v1505
        %1577 = vmatpush1.xpose.msra.mxu0 %v1504
        %1578 = vmatprep.subr.mxu0 %v1508
        %1579 = vmatpush1.xpose.msra.mxu0 %v1507
        %1580 = vmatprep.subr.mxu0 %v1511
        %1581 = vmatpush1.xpose.msra.mxu0 %v1510
        %1582 = vmatprep.subr.mxu0 %v1514
        %1583 = vmatpush1.xpose.msra.mxu0 %v1513
        %1584 = vmatprep.subr.mxu0 %v1517
        %1585 = vmatpush1.xpose.msra.mxu0 %v1516
        %1586 = vmatprep.subr.mxu0 %v1520
        %1587 = vmatpush1.xpose.msra.mxu0 %v1519
        %1588 = vmatprep.subr.mxu0 %v1523
        %1589 = vmatpush1.xpose.msra.mxu0 %v1522
        %1590 = vmatprep.subr.mxu0 %v1526
        %1591 = vmatpush1.xpose.msra.mxu0 %v1525
        %1592 = vmatprep.subr.mxu0 %v1529
        %1593 = vmatpush1.xpose.msra.mxu0 %v1528
        %1594 = vmatprep.mubr.f32.mxu0 %v624
        %1595 = vmatmul.mubr.f32.gmra.mrb[0].mxu0 %v622
        %v1596 = vpop.f32.mrb[0].mxu0
        %v1597 = vadd.f32 %v364, %v1596
        %v1598 = vpop.f32.mrb[0].mxu0
        %v1599 = vadd.f32 %v365, %v1598
        %1600 = vmatprep.mubr.f32.mxu0 %v630
        %1601 = vmatmul.mubr.f32.gmra.mrb[0].mxu0 %v628
        %v1602 = vpop.f32.mrb[0].mxu0
        %v1603 = vadd.f32 %v366, %v1602
        %v1604 = vpop.f32.mrb[0].mxu0
        %v1605 = vadd.f32 %v367, %v1604
        %1606 = vdwg.mxu0
        %1607 = vst [vmem:[%s363] sm:$0xff] %v1597
        %1608 = vst [vmem:[%s363 + $0x8] sm:$0xff] %v1599
        %1609 = vst [vmem:[%s363 + $0x10] sm:$0xff] %v1603
        %1610 = vst [vmem:[%s363 + $0x18] sm:$0xff] %v1605
        %s1611 = sand.u32 %s214, 1
        %s1612 = scalar_lea.sflag [#allocation4], %s1611
        %s1613 = sand.u32 %s214, 1
        %s1614 = smul.addr %s1613, 32
        %s1615 = scalar_lea.vmem [#allocation7], %s1614
        // Predicated region
        $region61: #{tpu_custom_call.1} parent=51 // pred_check
          %p1616 = pneg %p224
        $region62: #{tpu_custom_call.1} parent=51 // pred_check_branch
          %1618 = sbr.rel (%p1616) target = $region64
        $region63: #{tpu_custom_call.1} parent=51 // pred_region
          %s1620 = ssub.s32 512, 512
          %1621 = vsyncadd %s1612, %s1620
          %s1622 = smul.addr %s28, 4
          %s1623 = smul.addr %s1622, 128
          %s1624 = scalar_lea.hbm %s8, %s1623
          %s1625 = sshll.u32 %s1615, 4
          %s1626 = int_to_ptr.vmem [resolvable:$true] %s1625
          %1631 = dma.vmem_to_hbm [thread:$0]  %s1626, 512, %s1624, %s1612, 256, 256, 16
        $region64: #{tpu_custom_call.1} parent=51 // pred_fallthru
          _
      $region52: #{tpu_custom_call.1} parent=5 // pred_fallthru
        _
      %p1632 = scmp.le.s32.totalorder 2, %s23
      // Predicated region
      $region65: #{tpu_custom_call.1} parent=5 // pred_check
        %p1633 = pneg %p1632
      $region66: #{tpu_custom_call.1} parent=5 // pred_check_branch
        %1635 = sbr.rel (%p1633) target = $region68
      $region67: #{tpu_custom_call.1} parent=5 // pred_region
        %s1636 = ssub.s32 %s23, 2
        // Predicated region
        $region69: #{tpu_custom_call.1} parent=67 // pred_check
          %p1637 = pneg %p230
        $region70: #{tpu_custom_call.1} parent=67 // pred_check_branch
          %1639 = sbr.rel (%p1637) target = $region72
        $region71: #{tpu_custom_call.1} parent=67 // pred_region
          %s1640 = sand.u32 %s215, 1
          %s1641 = scalar_lea.sflag [#allocation4], %s1640
          %s1642 = sand.u32 %s215, 1
          %s1643 = smul.addr %s1642, 32
          %s1644 = scalar_lea.vmem [#allocation7], %s1643
          %1645 = dma.done %s1641, 512
        $region72: #{tpu_custom_call.1} parent=67 // pred_fallthru
          _
      $region68: #{tpu_custom_call.1} parent=5 // pred_fallthru
        _
    $region6: #{tpu_custom_call.1} parent=1 // loop_footer
      %s27 = sadd.s32 1, %s23
    $region7: #{tpu_custom_call.1} parent=1 // loop_footer_branch
      %22 = sbr.rel target = $region3
    $region8: #{tpu_custom_call.1} parent=1 // loop_exit
      _
    %1646 = vsyncpa [#allocation3], 1
    %s1647 = scalar_lea.sflag [#allocation3], 1
    %1648 = vsyncpa %s1647, 1
    %1649 = vsyncpa [#allocation6], 1
    %s1650 = scalar_lea.sflag [#allocation6], 1
    %1651 = vsyncpa %s1650, 1
    %1652 = vsyncpa [#allocation4], 1
    %s1653 = scalar_lea.sflag [#allocation4], 1
    %1654 = vsyncpa %s1653, 1

</llo_original>
